<compile_context>
chip_gen: v7x
topology: tpu7x:2x2x1
jax: 0.10.0
libtpu: 0.0.40
codegen_flags: <defaults>
</compile_context>

<pallas_src>
import functools

import jax
import jax.numpy as jnp
from jax.experimental import pallas as pl
from jax.experimental.pallas import tpu as pltpu


def _round_up(n, m):
    return ((n + m - 1) // m) * m


def _cdiv(a, b):
    return -(-a // b)


def _pack_layout(latent_dim, n_codes):
    """Static lane offsets for the packed (z_e, z_q, probs) output slab."""
    zq_off = _round_up(latent_dim, 8)
    pr_off = _round_up(zq_off + latent_dim, 32)
    pack_w = _round_up(pr_off + n_codes, 128)
    return zq_off, pr_off, pack_w


def _cvqvae_kernel(
    x_ref, c_ref,                           # batch-tiled activations (bf16)
    wex_ref, wec_ref, be_ref,               # encoder: x part, c part, bias
    wfc_ref, bfc_ref,                       # fc -> latent
    embw_ref,                               # codebook E^T pre-placed at packed lanes (L, 128) f32
    wdz_ref, wdc_ref, bd1_ref,              # decoder layer-1 (z_q part f32, c part bf16)
    wd2_ref, bd2_ref,                       # decoder layer-2
    recon_ref, packed_ref,                  # outputs (bf16, lane-dense)
    *, n_codes,
):
    f32 = jnp.float32
    L = wdz_ref.shape[0]
    K = n_codes
    pack_w = packed_ref.shape[-1]
    zq_off, pr_off, _ = _pack_layout(L, K)
    tb = x_ref.shape[0]

    # ---------------- encoder: ReLU(x @ Wx + c @ Wc + b)  (MXU, bf16 -> f32) ---
    h = (jnp.dot(x_ref[...], wex_ref[...], preferred_element_type=f32)
         + jnp.dot(c_ref[...], wec_ref[...], preferred_element_type=f32)
         + be_ref[...])
    h = jnp.maximum(h, 0.0)

    # ---------------- fc: embed_dim -> latent_dim (MXU) ------------------------
    z_e = (jnp.dot(h.astype(jnp.bfloat16), wfc_ref[...], preferred_element_type=f32)
           + bfc_ref[...])                                      # (tb, L) f32

    # ---------------- codebook (vector quantization) on VPU/XLU ----------------
    # Computed directly at 128-lane width: code k lives at lane pr_off + k in
    # embw (other lanes are zero), so probs come out already in their packed
    # lane positions and no lane-scatter / concat is ever needed.
    embw = embw_ref[...]                                        # (L, pack_w) f32
    lane = jax.lax.broadcasted_iota(jnp.int32, (1, pack_w), 1)
    code_mask = jnp.logical_and(lane >= pr_off, lane < pr_off + K)

    d2 = jnp.zeros((tb, pack_w), f32)
    for l in range(L):                                          # static unroll, L tiny
        diff = z_e[:, l:l + 1] - embw[l:l + 1, :]
        d2 = d2 + diff * diff                                   # exact (z - e)^2

    neg = -d2
    m = jnp.max(jnp.where(code_mask, neg, -1e30), axis=-1, keepdims=True)
    ex = jnp.where(code_mask, jnp.exp(neg - m), 0.0)
    probs = ex / jnp.sum(ex, axis=-1, keepdims=True)            # zero outside code lanes

    # hard nearest code; reuse softmax max: min(d2) == -max(-d2).
    # first-occurrence tie-break, matching torch.argmin.
    min_d = -m
    code_id = lane - pr_off
    idx = jnp.min(jnp.where(jnp.logical_and(code_mask, d2 <= min_d), code_id, K),
                  axis=-1, keepdims=True)
    onehot = jnp.logical_and(code_mask, code_id == idx).astype(f32)

    # z_q columns via masked XLU reduction (output width L=3 is MXU-hostile)
    zq_cols = [jnp.sum(onehot * embw[l:l + 1, :], axis=-1, keepdims=True)
               for l in range(L)]                               # each (tb, 1)

    # ---------------- decoder: Linear([z_q, c]) + ReLU, Linear + sigmoid -------
    # c part on MXU (bf16); z_q part (contraction dim L=3) as VPU FMAs.
    h2 = jnp.dot(c_ref[...], wdc_ref[...], preferred_element_type=f32) + bd1_ref[...]
    for l in range(L):
        h2 = h2 + zq_cols[l] * wdz_ref[l:l + 1, :]
    h2 = jnp.maximum(h2, 0.0)

    logits = (jnp.dot(h2.astype(jnp.bfloat16), wd2_ref[...], preferred_element_type=f32)
              + bd2_ref[...])
    recon_ref[...] = jax.nn.sigmoid(logits).astype(recon_ref.dtype)

    # -------- packed (z_e | z_q | probs) slab: registers -> ONE full-lane store
    packed = probs                                              # already at [pr_off, pr_off+K)
    for l in range(L):
        packed = packed + jnp.where(lane == l, z_e[:, l:l + 1], 0.0)
        packed = packed + jnp.where(lane == (zq_off + l), zq_cols[l], 0.0)
    packed_ref[...] = packed.astype(packed_ref.dtype)


def cvqvae_forward(x_nchw, c, params, *, tb=512):
    """Runs the fused CVQVAE forward kernel.

    Args:
      x_nchw: (B, 1, H, W) float32 image (NCHW, like the PyTorch module).
      c:      (B, COND) float32 condition (e.g. one-hot label).
      params: dict of weights (see init_params).
      tb:     batch tile cap (rounded to a multiple of 16, capped at 512).
    Returns:
      (recon (B,1,H,W), z_e (B,L), z_q (B,L), probs (B,K)) — all float32.
    """
    B, _, H, W = x_nchw.shape
    img_dim = H * W
    cond_dim = c.shape[1]

    emb = params["emb"]                    # (K, L)
    K, L = emb.shape
    embed_dim = params["wex"].shape[1]
    hidden = params["wd2"].shape[0]
    out_dim = params["wd2"].shape[1]
    zq_off, pr_off, pack_w = _pack_layout(L, K)

    # --- batch tiling: multiple of 16 (bf16 sublane packing), cap 512, clamp to
    # the actual batch, and keep >= 2 grid steps when there is enough work so the
    # "parallel" batch axis feeds both v7x TensorCores.
    tb_cap = _round_up(max(16, min(int(tb), 512)), 16)
    b16 = _round_up(B, 16)
    n_steps = _cdiv(b16, tb_cap)
    if b16 >= 32:
        n_steps = max(n_steps, 2)
    tb_eff = _round_up(_cdiv(b16, n_steps), 16)
    b_pad = tb_eff * n_steps
    pad = b_pad - B

    # separate x / c inputs (no concat round-trip); cast fused with the pad
    x_bf = x_nchw.reshape(B, img_dim).astype(jnp.bfloat16)
    c_bf = c.astype(jnp.bfloat16)
    if pad:
        x_bf = jnp.pad(x_bf, ((0, pad), (0, 0)))
        c_bf = jnp.pad(c_bf, ((0, pad), (0, 0)))

    inputs = (
        x_bf, c_bf,
        params["wex"].astype(jnp.bfloat16), params["wec"].astype(jnp.bfloat16),
        params["be"],
        params["wfc"].astype(jnp.bfloat16), params["bfc"],
        params["embT_wide"],
        params["wdz"], params["wdc"].astype(jnp.bfloat16), params["bd1"],
        params["wd2"].astype(jnp.bfloat16), params["bd2"],
    )

    grid = (b_pad // tb_eff,)

    def batch_spec(cols):                   # batch-tiled activations / outputs
        return pl.BlockSpec((tb_eff, cols), lambda i: (i, 0))

    def weight_spec(shape):                 # constant block index -> VMEM-resident
        return pl.BlockSpec(shape, lambda i: tuple(0 for _ in shape))

    in_specs = ([batch_spec(img_dim), batch_spec(cond_dim)]
                + [weight_spec(a.shape) for a in inputs[2:]])

    out_shapes = (
        jax.ShapeDtypeStruct((b_pad, out_dim), jnp.bfloat16),   # recon (flat, bf16)
        jax.ShapeDtypeStruct((b_pad, pack_w), jnp.bfloat16),    # packed z_e|z_q|probs
    )
    out_specs = [batch_spec(out_dim), batch_spec(pack_w)]

    flops = 2 * b_pad * (img_dim * embed_dim + cond_dim * embed_dim
                         + embed_dim * L + 2 * L * K
                         + cond_dim * hidden + L * hidden + hidden * out_dim)
    transcendentals = b_pad * (K + out_dim)
    bytes_accessed = (sum(int(a.size) * a.dtype.itemsize for a in inputs)
                      + b_pad * (out_dim + pack_w) * 2)
    cost = pl.CostEstimate(flops=int(flops),
                           transcendentals=int(transcendentals),
                           bytes_accessed=int(bytes_accessed))

    kernel = functools.partial(_cvqvae_kernel, n_codes=K)

    recon_flat, packed = pl.pallas_call(
        kernel,
        out_shape=out_shapes,
        grid=grid,
        in_specs=in_specs,
        out_specs=out_specs,
        compiler_params=pltpu.CompilerParams(
            dimension_semantics=("parallel",)),
        cost_estimate=cost,
    )(*inputs)

    recon = recon_flat[:B].astype(jnp.float32).reshape(B, 1, H, W)
    packed = packed[:B].astype(jnp.float32)
    z_e = packed[:, 0:L]
    z_q = packed[:, zq_off:zq_off + L]
    probs = packed[:, pr_off:pr_off + K]
    return recon, z_e, z_q, probs


def init_params(key, *, img_dim, cond_dim, embed_dim, latent_dim, n_codes, hidden):
    # NOTE: hidden=256 would fully fill the 256-wide MXU on v6e/v7x for the two
    # decoder matmuls; 128 is kept to match the canonical module (and the kernel
    # is HBM-bound anyway).
    ks = jax.random.split(key, 10)
    s = lambda fan_in: 1.0 / jnp.sqrt(jnp.float32(fan_in))
    emb = jax.random.normal(ks[5], (n_codes, latent_dim), jnp.float32)
    _, pr_off, pack_w = _pack_layout(latent_dim, n_codes)
    # codebook E^T pre-placed at its packed lane offsets (code k at lane pr_off+k)
    embT_wide = jnp.zeros((latent_dim, pack_w), jnp.float32)
    embT_wide = embT_wide.at[:, pr_off:pr_off + n_codes].set(emb.T)
    p = {
        # encoder Linear(img_dim + cond_dim -> embed_dim), split into x / c parts
        "wex": jax.random.normal(ks[0], (img_dim, embed_dim), jnp.float32)
               * s(img_dim + cond_dim),
        "wec": jax.random.normal(ks[1], (cond_dim, embed_dim), jnp.float32)
               * s(img_dim + cond_dim),
        "be":  jax.random.normal(ks[2], (1, embed_dim), jnp.float32) * 0.01,
        # fc Linear(embed_dim -> latent_dim)
        "wfc": jax.random.normal(ks[3], (embed_dim, latent_dim), jnp.float32) * s(embed_dim),
        "bfc": jax.random.normal(ks[4], (1, latent_dim), jnp.float32) * 0.01,
        # codebook embeddings (K, latent_dim) + lane-placed transpose
        "emb": emb,
        "embT_wide": embT_wide,
        # decoder layer 1 Linear(latent_dim + cond_dim -> hidden), split parts
        "wdz": jax.random.normal(ks[6], (latent_dim, hidden), jnp.float32)
               * s(latent_dim + cond_dim),
        "wdc": jax.random.normal(ks[7], (cond_dim, hidden), jnp.float32)
               * s(latent_dim + cond_dim),
        "bd1": jax.random.normal(ks[8], (1, hidden), jnp.float32) * 0.01,
        # decoder layer 2 Linear(hidden -> img_dim)
        "wd2": jax.random.normal(ks[9], (hidden, img_dim), jnp.float32) * s(hidden),
        "bd2": jnp.zeros((1, img_dim), jnp.float32),
    }
    return p


def _reference_forward(x_nchw, c, params):
    """Pure-JAX reference mirroring the kernel math (bf16 matmuls, f32 accum)."""
    bf16, f32 = jnp.bfloat16, jnp.float32
    B, _, H, W = x_nchw.shape
    x = x_nchw.reshape(B, H * W).astype(bf16)
    cb = c.astype(bf16)
    h = jnp.maximum(
        jnp.dot(x, params["wex"].astype(bf16), preferred_element_type=f32)
        + jnp.dot(cb, params["wec"].astype(bf16), preferred_element_type=f32)
        + params["be"], 0.0)
    z_e = (jnp.dot(h.astype(bf16), params["wfc"].astype(bf16), preferred_element_type=f32)
           + params["bfc"])
    E = params["emb"]
    d2 = jnp.sum((z_e[:, None, :] - E[None, :, :]) ** 2, axis=-1)
    probs = jax.nn.softmax(-d2, axis=-1)
    idx = jnp.argmin(d2, axis=-1)
    z_q = E[idx]
    h2 = jnp.maximum(
        z_q @ params["wdz"]
        + jnp.dot(cb, params["wdc"].astype(bf16), preferred_element_type=f32)
        + params["bd1"], 0.0)
    recon = jax.nn.sigmoid(
        jnp.dot(h2.astype(bf16), params["wd2"].astype(bf16), preferred_element_type=f32)
        + params["bd2"]).reshape(B, 1, H, W)
    return recon, z_e, z_q, probs


if __name__ == "__main__":
    # Small MNIST-like setup (batch deliberately not a tile multiple to exercise
    # padding; the tiling logic clamps to a 16-row tile and a 2-step grid).
    B, H, W = 24, 16, 16         # batch, spatial
    COND = 16                    # condition (one-hot-ish) width
    EMBED_DIM = 256              # embed_dim from the module
    LATENT_DIM = 3               # latent_dim from the module
    N_CODES = 32                 # codebook size
    HIDDEN = 128                 # decoder hidden width
    IMG_DIM = H * W

    key = jax.random.PRNGKey(0)
    kx, kc, kp = jax.random.split(key, 3)
    x = jax.random.uniform(kx, (B, 1, H, W), jnp.float32)          # NCHW image
    labels = jax.random.randint(kc, (B,), 0, 10)
    c = jax.nn.one_hot(labels, COND, dtype=jnp.float32)            # (B, COND)

    params = init_params(kp, img_dim=IMG_DIM, cond_dim=COND, embed_dim=EMBED_DIM,
                         latent_dim=LATENT_DIM, n_codes=N_CODES, hidden=HIDDEN)

    recon, z_e, z_q, probs = jax.block_until_ready(
        cvqvae_forward(x, c, params))

    # sanity check against a pure-JAX reference (same bf16/f32 mixed precision;
    # recon / packed are bf16 on the HBM path, well within tolerance)
    r_recon, r_ze, r_zq, r_probs = _reference_forward(x, c, params)
    for got, ref in ((recon, r_recon), (z_e, r_ze), (z_q, r_zq), (probs, r_probs)):
        assert jnp.allclose(got, ref, rtol=2e-2, atol=2e-2), "mismatch vs reference"

    assert recon.shape == (B, 1, H, W)
    assert z_e.shape == (B, LATENT_DIM)
    assert z_q.shape == (B, LATENT_DIM)
    assert probs.shape == (B, N_CODES)

    print("KERNEL_OK")
</pallas_src>

<mosaic_0001>
module attributes {stable_mosaic.version = 11 : i64} {
  func.func @_cvqvae_kernel(%arg0: i32, %arg1: memref<16x256xbf16, #tpu.memory_space<vmem>>, %arg2: memref<16x16xbf16, #tpu.memory_space<vmem>>, %arg3: memref<256x256xbf16, #tpu.memory_space<vmem>>, %arg4: memref<16x256xbf16, #tpu.memory_space<vmem>>, %arg5: memref<1x256xf32, #tpu.memory_space<vmem>>, %arg6: memref<256x3xbf16, #tpu.memory_space<vmem>>, %arg7: memref<1x3xf32, #tpu.memory_space<vmem>>, %arg8: memref<3x128xf32, #tpu.memory_space<vmem>>, %arg9: memref<3x128xf32, #tpu.memory_space<vmem>>, %arg10: memref<16x128xbf16, #tpu.memory_space<vmem>>, %arg11: memref<1x128xf32, #tpu.memory_space<vmem>>, %arg12: memref<128x256xbf16, #tpu.memory_space<vmem>>, %arg13: memref<1x256xf32, #tpu.memory_space<vmem>>, %arg14: memref<16x256xbf16, #tpu.memory_space<vmem>>, %arg15: memref<16x128xbf16, #tpu.memory_space<vmem>>) attributes {dimension_semantics = [#tpu.dimension_semantics<parallel>], iteration_bounds = array<i64: 2>, scalar_prefetch = 0 : i64, scratch_operands = 0 : i64, tpu.core_type = #tpu.core_type<tc>, window_params = [{transform_indices = @transform_0, window_bounds = array<i64: 16, 256>}, {transform_indices = @transform_1, window_bounds = array<i64: 16, 16>}, {pipeline_mode = #tpu.pipeline_mode<synchronous>, transform_indices = @transform_2, window_bounds = array<i64: 256, 256>}, {pipeline_mode = #tpu.pipeline_mode<synchronous>, transform_indices = @transform_3, window_bounds = array<i64: 16, 256>}, {pipeline_mode = #tpu.pipeline_mode<synchronous>, transform_indices = @transform_4, window_bounds = array<i64: 1, 256>}, {pipeline_mode = #tpu.pipeline_mode<synchronous>, transform_indices = @transform_5, window_bounds = array<i64: 256, 3>}, {pipeline_mode = #tpu.pipeline_mode<synchronous>, transform_indices = @transform_6, window_bounds = array<i64: 1, 3>}, {pipeline_mode = #tpu.pipeline_mode<synchronous>, transform_indices = @transform_7, window_bounds = array<i64: 3, 128>}, {pipeline_mode = #tpu.pipeline_mode<synchronous>, transform_indices = @transform_8, window_bounds = array<i64: 3, 128>}, {pipeline_mode = #tpu.pipeline_mode<synchronous>, transform_indices = @transform_9, window_bounds = array<i64: 16, 128>}, {pipeline_mode = #tpu.pipeline_mode<synchronous>, transform_indices = @transform_10, window_bounds = array<i64: 1, 128>}, {pipeline_mode = #tpu.pipeline_mode<synchronous>, transform_indices = @transform_11, window_bounds = array<i64: 128, 256>}, {pipeline_mode = #tpu.pipeline_mode<synchronous>, transform_indices = @transform_12, window_bounds = array<i64: 1, 256>}, {transform_indices = @transform_13, window_bounds = array<i64: 16, 256>}, {transform_indices = @transform_14, window_bounds = array<i64: 16, 128>}]} {
    %c0 = arith.constant 0 : index
    %c0_0 = arith.constant 0 : index
    %0 = vector.load %arg1[%c0, %c0_0] : memref<16x256xbf16, #tpu.memory_space<vmem>>, vector<16x256xbf16>
    %c0_1 = arith.constant 0 : index
    %c0_2 = arith.constant 0 : index
    %1 = vector.load %arg3[%c0_1, %c0_2] : memref<256x256xbf16, #tpu.memory_space<vmem>>, vector<256x256xbf16>
    %cst = arith.constant dense<0.000000e+00> : vector<16x256xf32>
    %2 = tpu.matmul %0, %1, %cst {dimension_numbers = #tpu.dot_dimension_numbers<[1], [0], [0], [1], [0, 0, 1, 1], [], []>} : vector<16x256xbf16>, vector<256x256xbf16>, vector<16x256xf32> -> vector<16x256xf32>
    %c0_3 = arith.constant 0 : index
    %c0_4 = arith.constant 0 : index
    %3 = vector.load %arg2[%c0_3, %c0_4] : memref<16x16xbf16, #tpu.memory_space<vmem>>, vector<16x16xbf16>
    %c0_5 = arith.constant 0 : index
    %c0_6 = arith.constant 0 : index
    %4 = vector.load %arg4[%c0_5, %c0_6] : memref<16x256xbf16, #tpu.memory_space<vmem>>, vector<16x256xbf16>
    %cst_7 = arith.constant dense<0.000000e+00> : vector<16x256xf32>
    %5 = tpu.matmul %3, %4, %cst_7 {dimension_numbers = #tpu.dot_dimension_numbers<[1], [0], [0], [1], [0, 0, 1, 1], [], []>} : vector<16x16xbf16>, vector<16x256xbf16>, vector<16x256xf32> -> vector<16x256xf32>
    %6 = arith.addf %2, %5 : vector<16x256xf32>
    %c0_8 = arith.constant 0 : index
    %c0_9 = arith.constant 0 : index
    %7 = vector.load %arg5[%c0_8, %c0_9] : memref<1x256xf32, #tpu.memory_space<vmem>>, vector<1x256xf32>
    %8 = vector.broadcast %7 : vector<1x256xf32> to vector<16x256xf32>
    %9 = arith.addf %6, %8 : vector<16x256xf32>
    %cst_10 = arith.constant 0.000000e+00 : f32
    %10 = vector.broadcast %cst_10 : f32 to vector<16x256xf32>
    %11 = arith.maximumf %9, %10 : vector<16x256xf32>
    %12 = arith.truncf %11 : vector<16x256xf32> to vector<16x256xbf16>
    %c0_11 = arith.constant 0 : index
    %c0_12 = arith.constant 0 : index
    %13 = vector.load %arg6[%c0_11, %c0_12] : memref<256x3xbf16, #tpu.memory_space<vmem>>, vector<256x3xbf16>
    %cst_13 = arith.constant dense<0.000000e+00> : vector<16x3xf32>
    %14 = tpu.matmul %12, %13, %cst_13 {dimension_numbers = #tpu.dot_dimension_numbers<[1], [0], [0], [1], [0, 0, 1, 1], [], []>} : vector<16x256xbf16>, vector<256x3xbf16>, vector<16x3xf32> -> vector<16x3xf32>
    %c0_14 = arith.constant 0 : index
    %c0_15 = arith.constant 0 : index
    %15 = vector.load %arg7[%c0_14, %c0_15] : memref<1x3xf32, #tpu.memory_space<vmem>>, vector<1x3xf32>
    %16 = vector.broadcast %15 : vector<1x3xf32> to vector<16x3xf32>
    %17 = arith.addf %14, %16 : vector<16x3xf32>
    %c0_16 = arith.constant 0 : index
    %c0_17 = arith.constant 0 : index
    %18 = vector.load %arg8[%c0_16, %c0_17] : memref<3x128xf32, #tpu.memory_space<vmem>>, vector<3x128xf32>
    %19 = tpu.iota {dimensions = array<i32: 1>} : vector<1x128xi32>
    %c32_i32 = arith.constant 32 : i32
    %20 = vector.broadcast %c32_i32 : i32 to vector<1x128xi32>
    %21 = arith.cmpi sge, %19, %20 : vector<1x128xi32>
    %c64_i32 = arith.constant 64 : i32
    %22 = vector.broadcast %c64_i32 : i32 to vector<1x128xi32>
    %23 = arith.cmpi slt, %19, %22 : vector<1x128xi32>
    %24 = arith.andi %21, %23 : vector<1x128xi1>
    %cst_18 = arith.constant 0.000000e+00 : f32
    %25 = vector.broadcast %cst_18 : f32 to vector<16x128xf32>
    %26 = vector.extract_strided_slice %17 {offsets = [0, 0], sizes = [16, 1], strides = [1, 1]} : vector<16x3xf32> to vector<16x1xf32>
    %27 = vector.extract_strided_slice %18 {offsets = [0, 0], sizes = [1, 128], strides = [1, 1]} : vector<3x128xf32> to vector<1x128xf32>
    %28 = vector.broadcast %26 : vector<16x1xf32> to vector<16x128xf32>
    %29 = vector.broadcast %27 : vector<1x128xf32> to vector<16x128xf32>
    %30 = arith.subf %28, %29 : vector<16x128xf32>
    %31 = arith.mulf %30, %30 : vector<16x128xf32>
    %32 = arith.addf %25, %31 : vector<16x128xf32>
    %33 = vector.extract_strided_slice %17 {offsets = [0, 1], sizes = [16, 1], strides = [1, 1]} : vector<16x3xf32> to vector<16x1xf32>
    %34 = vector.extract_strided_slice %18 {offsets = [1, 0], sizes = [1, 128], strides = [1, 1]} : vector<3x128xf32> to vector<1x128xf32>
    %35 = vector.broadcast %33 : vector<16x1xf32> to vector<16x128xf32>
    %36 = vector.broadcast %34 : vector<1x128xf32> to vector<16x128xf32>
    %37 = arith.subf %35, %36 : vector<16x128xf32>
    %38 = arith.mulf %37, %37 : vector<16x128xf32>
    %39 = arith.addf %32, %38 : vector<16x128xf32>
    %40 = vector.extract_strided_slice %17 {offsets = [0, 2], sizes = [16, 1], strides = [1, 1]} : vector<16x3xf32> to vector<16x1xf32>
    %41 = vector.extract_strided_slice %18 {offsets = [2, 0], sizes = [1, 128], strides = [1, 1]} : vector<3x128xf32> to vector<1x128xf32>
    %42 = vector.broadcast %40 : vector<16x1xf32> to vector<16x128xf32>
    %43 = vector.broadcast %41 : vector<1x128xf32> to vector<16x128xf32>
    %44 = arith.subf %42, %43 : vector<16x128xf32>
    %45 = arith.mulf %44, %44 : vector<16x128xf32>
    %46 = arith.addf %39, %45 : vector<16x128xf32>
    %cst_19 = arith.constant 0.000000e+00 : f32
    %47 = vector.broadcast %cst_19 : f32 to vector<16x128xf32>
    %48 = arith.subf %47, %46 : vector<16x128xf32>
    %cst_20 = arith.constant -1.000000e+30 : f32
    %49 = vector.shape_cast %24 : vector<1x128xi1> to vector<1x128xi1>
    %50 = vector.broadcast %49 : vector<1x128xi1> to vector<16x128xi1>
    %51 = vector.broadcast %cst_20 : f32 to vector<16x128xf32>
    %52 = arith.select %50, %48, %51 : vector<16x128xi1>, vector<16x128xf32>
    %cst_21 = arith.constant dense<0xFF800000> : vector<16xf32>
    %53 = vector.multi_reduction <maximumf>, %52, %cst_21 [1] : vector<16x128xf32> to vector<16xf32>
    %54 = vector.shape_cast %53 : vector<16xf32> to vector<16x1xf32>
    %55 = vector.broadcast %54 : vector<16x1xf32> to vector<16x128xf32>
    %56 = arith.subf %48, %55 : vector<16x128xf32>
    %57 = math.exp %56 : vector<16x128xf32>
    %cst_22 = arith.constant 0.000000e+00 : f32
    %58 = vector.shape_cast %24 : vector<1x128xi1> to vector<1x128xi1>
    %59 = vector.broadcast %58 : vector<1x128xi1> to vector<16x128xi1>
    %60 = vector.broadcast %cst_22 : f32 to vector<16x128xf32>
    %61 = arith.select %59, %57, %60 : vector<16x128xi1>, vector<16x128xf32>
    %cst_23 = arith.constant dense<0.000000e+00> : vector<16xf32>
    %62 = vector.multi_reduction <add>, %61, %cst_23 [1] : vector<16x128xf32> to vector<16xf32>
    %63 = vector.shape_cast %62 : vector<16xf32> to vector<16x1xf32>
    %64 = vector.broadcast %63 : vector<16x1xf32> to vector<16x128xf32>
    %65 = arith.divf %61, %64 : vector<16x128xf32>
    %cst_24 = arith.constant 0.000000e+00 : f32
    %66 = vector.broadcast %cst_24 : f32 to vector<16x1xf32>
    %67 = arith.subf %66, %54 : vector<16x1xf32>
    %c32_i32_25 = arith.constant 32 : i32
    %68 = vector.broadcast %c32_i32_25 : i32 to vector<1x128xi32>
    %69 = arith.subi %19, %68 : vector<1x128xi32>
    %70 = vector.broadcast %67 : vector<16x1xf32> to vector<16x128xf32>
    %71 = arith.cmpf ole, %46, %70 : vector<16x128xf32>
    %72 = vector.broadcast %24 : vector<1x128xi1> to vector<16x128xi1>
    %73 = arith.andi %72, %71 : vector<16x128xi1>
    %c32_i32_26 = arith.constant 32 : i32
    %74 = vector.shape_cast %69 : vector<1x128xi32> to vector<1x128xi32>
    %75 = vector.broadcast %74 : vector<1x128xi32> to vector<16x128xi32>
    %76 = vector.broadcast %c32_i32_26 : i32 to vector<16x128xi32>
    %77 = arith.select %73, %75, %76 : vector<16x128xi1>, vector<16x128xi32>
    %cst_27 = arith.constant dense<2147483647> : vector<16xi32>
    %78 = vector.multi_reduction <minsi>, %77, %cst_27 [1] : vector<16x128xi32> to vector<16xi32>
    %79 = vector.shape_cast %78 : vector<16xi32> to vector<16x1xi32>
    %80 = vector.broadcast %69 : vector<1x128xi32> to vector<16x128xi32>
    %81 = vector.broadcast %79 : vector<16x1xi32> to vector<16x128xi32>
    %82 = arith.cmpi eq, %80, %81 : vector<16x128xi32>
    %83 = vector.broadcast %24 : vector<1x128xi1> to vector<16x128xi1>
    %84 = arith.andi %83, %82 : vector<16x128xi1>
    %85 = arith.extui %84 : vector<16x128xi1> to vector<16x128xi32>
    %86 = arith.sitofp %85 : vector<16x128xi32> to vector<16x128xf32>
    %87 = vector.extract_strided_slice %18 {offsets = [0, 0], sizes = [1, 128], strides = [1, 1]} : vector<3x128xf32> to vector<1x128xf32>
    %88 = vector.broadcast %87 : vector<1x128xf32> to vector<16x128xf32>
    %89 = arith.mulf %86, %88 : vector<16x128xf32>
    %cst_28 = arith.constant dense<0.000000e+00> : vector<16xf32>
    %90 = vector.multi_reduction <add>, %89, %cst_28 [1] : vector<16x128xf32> to vector<16xf32>
    %91 = vector.shape_cast %90 : vector<16xf32> to vector<16x1xf32>
    %92 = vector.extract_strided_slice %18 {offsets = [1, 0], sizes = [1, 128], strides = [1, 1]} : vector<3x128xf32> to vector<1x128xf32>
    %93 = vector.broadcast %92 : vector<1x128xf32> to vector<16x128xf32>
    %94 = arith.mulf %86, %93 : vector<16x128xf32>
    %cst_29 = arith.constant dense<0.000000e+00> : vector<16xf32>
    %95 = vector.multi_reduction <add>, %94, %cst_29 [1] : vector<16x128xf32> to vector<16xf32>
    %96 = vector.shape_cast %95 : vector<16xf32> to vector<16x1xf32>
    %97 = vector.extract_strided_slice %18 {offsets = [2, 0], sizes = [1, 128], strides = [1, 1]} : vector<3x128xf32> to vector<1x128xf32>
    %98 = vector.broadcast %97 : vector<1x128xf32> to vector<16x128xf32>
    %99 = arith.mulf %86, %98 : vector<16x128xf32>
    %cst_30 = arith.constant dense<0.000000e+00> : vector<16xf32>
    %100 = vector.multi_reduction <add>, %99, %cst_30 [1] : vector<16x128xf32> to vector<16xf32>
    %101 = vector.shape_cast %100 : vector<16xf32> to vector<16x1xf32>
    %c0_31 = arith.constant 0 : index
    %c0_32 = arith.constant 0 : index
    %102 = vector.load %arg2[%c0_31, %c0_32] : memref<16x16xbf16, #tpu.memory_space<vmem>>, vector<16x16xbf16>
    %c0_33 = arith.constant 0 : index
    %c0_34 = arith.constant 0 : index
    %103 = vector.load %arg10[%c0_33, %c0_34] : memref<16x128xbf16, #tpu.memory_space<vmem>>, vector<16x128xbf16>
    %cst_35 = arith.constant dense<0.000000e+00> : vector<16x128xf32>
    %104 = tpu.matmul %102, %103, %cst_35 {dimension_numbers = #tpu.dot_dimension_numbers<[1], [0], [0], [1], [0, 0, 1, 1], [], []>} : vector<16x16xbf16>, vector<16x128xbf16>, vector<16x128xf32> -> vector<16x128xf32>
    %c0_36 = arith.constant 0 : index
    %c0_37 = arith.constant 0 : index
    %105 = vector.load %arg11[%c0_36, %c0_37] : memref<1x128xf32, #tpu.memory_space<vmem>>, vector<1x128xf32>
    %106 = vector.broadcast %105 : vector<1x128xf32> to vector<16x128xf32>
    %107 = arith.addf %104, %106 : vector<16x128xf32>
    %c0_38 = arith.constant 0 : index
    %c0_39 = arith.constant 0 : index
    %108 = vector.load %arg9[%c0_38, %c0_39] : memref<3x128xf32, #tpu.memory_space<vmem>>, vector<1x128xf32>
    %109 = vector.broadcast %91 : vector<16x1xf32> to vector<16x128xf32>
    %110 = vector.broadcast %108 : vector<1x128xf32> to vector<16x128xf32>
    %111 = arith.mulf %109, %110 : vector<16x128xf32>
    %112 = arith.addf %107, %111 : vector<16x128xf32>
    %c1 = arith.constant 1 : index
    %c0_40 = arith.constant 0 : index
    %113 = vector.load %arg9[%c1, %c0_40] : memref<3x128xf32, #tpu.memory_space<vmem>>, vector<1x128xf32>
    %114 = vector.broadcast %96 : vector<16x1xf32> to vector<16x128xf32>
    %115 = vector.broadcast %113 : vector<1x128xf32> to vector<16x128xf32>
    %116 = arith.mulf %114, %115 : vector<16x128xf32>
    %117 = arith.addf %112, %116 : vector<16x128xf32>
    %c2 = arith.constant 2 : index
    %c0_41 = arith.constant 0 : index
    %118 = vector.load %arg9[%c2, %c0_41] : memref<3x128xf32, #tpu.memory_space<vmem>>, vector<1x128xf32>
    %119 = vector.broadcast %101 : vector<16x1xf32> to vector<16x128xf32>
    %120 = vector.broadcast %118 : vector<1x128xf32> to vector<16x128xf32>
    %121 = arith.mulf %119, %120 : vector<16x128xf32>
    %122 = arith.addf %117, %121 : vector<16x128xf32>
    %cst_42 = arith.constant 0.000000e+00 : f32
    %123 = vector.broadcast %cst_42 : f32 to vector<16x128xf32>
    %124 = arith.maximumf %122, %123 : vector<16x128xf32>
    %125 = arith.truncf %124 : vector<16x128xf32> to vector<16x128xbf16>
    %c0_43 = arith.constant 0 : index
    %c0_44 = arith.constant 0 : index
    %126 = vector.load %arg12[%c0_43, %c0_44] : memref<128x256xbf16, #tpu.memory_space<vmem>>, vector<128x256xbf16>
    %cst_45 = arith.constant dense<0.000000e+00> : vector<16x256xf32>
    %127 = tpu.matmul %125, %126, %cst_45 {dimension_numbers = #tpu.dot_dimension_numbers<[1], [0], [0], [1], [0, 0, 1, 1], [], []>} : vector<16x128xbf16>, vector<128x256xbf16>, vector<16x256xf32> -> vector<16x256xf32>
    %c0_46 = arith.constant 0 : index
    %c0_47 = arith.constant 0 : index
    %128 = vector.load %arg13[%c0_46, %c0_47] : memref<1x256xf32, #tpu.memory_space<vmem>>, vector<1x256xf32>
    %129 = vector.broadcast %128 : vector<1x256xf32> to vector<16x256xf32>
    %130 = arith.addf %127, %129 : vector<16x256xf32>
    %131 = arith.negf %130 : vector<16x256xf32>
    %132 = math.exp %131 : vector<16x256xf32>
    %cst_48 = arith.constant 1.000000e+00 : f32
    %133 = vector.broadcast %cst_48 : f32 to vector<16x256xf32>
    %134 = arith.addf %133, %132 : vector<16x256xf32>
    %135 = arith.divf %133, %134 : vector<16x256xf32>
    %136 = arith.truncf %135 : vector<16x256xf32> to vector<16x256xbf16>
    %c0_49 = arith.constant 0 : index
    %c0_50 = arith.constant 0 : index
    %137 = vector.load %arg14[%c0_49, %c0_50] : memref<16x256xbf16, #tpu.memory_space<vmem>>, vector<16x256xbf16>
    tpu.vector_store %arg14[%c0_49, %c0_50], %136 {strides = array<i32>} : memref<16x256xbf16, #tpu.memory_space<vmem>>, vector<16x256xbf16>,
    %c0_i32 = arith.constant 0 : i32
    %138 = vector.broadcast %c0_i32 : i32 to vector<1x128xi32>
    %139 = arith.cmpi eq, %19, %138 : vector<1x128xi32>
    %140 = vector.extract_strided_slice %17 {offsets = [0, 0], sizes = [16, 1], strides = [1, 1]} : vector<16x3xf32> to vector<16x1xf32>
    %cst_51 = arith.constant 0.000000e+00 : f32
    %141 = vector.shape_cast %139 : vector<1x128xi1> to vector<1x128xi1>
    %142 = vector.broadcast %141 : vector<1x128xi1> to vector<16x128xi1>
    %143 = vector.shape_cast %140 : vector<16x1xf32> to vector<16x1xf32>
    %144 = vector.broadcast %143 : vector<16x1xf32> to vector<16x128xf32>
    %145 = vector.broadcast %cst_51 : f32 to vector<16x128xf32>
    %146 = arith.select %142, %144, %145 : vector<16x128xi1>, vector<16x128xf32>
    %147 = arith.addf %65, %146 : vector<16x128xf32>
    %c8_i32 = arith.constant 8 : i32
    %148 = vector.broadcast %c8_i32 : i32 to vector<1x128xi32>
    %149 = arith.cmpi eq, %19, %148 : vector<1x128xi32>
    %cst_52 = arith.constant 0.000000e+00 : f32
    %150 = vector.shape_cast %149 : vector<1x128xi1> to vector<1x128xi1>
    %151 = vector.broadcast %150 : vector<1x128xi1> to vector<16x128xi1>
    %152 = vector.shape_cast %91 : vector<16x1xf32> to vector<16x1xf32>
    %153 = vector.broadcast %152 : vector<16x1xf32> to vector<16x128xf32>
    %154 = vector.broadcast %cst_52 : f32 to vector<16x128xf32>
    %155 = arith.select %151, %153, %154 : vector<16x128xi1>, vector<16x128xf32>
    %156 = arith.addf %147, %155 : vector<16x128xf32>
    %c1_i32 = arith.constant 1 : i32
    %157 = vector.broadcast %c1_i32 : i32 to vector<1x128xi32>
    %158 = arith.cmpi eq, %19, %157 : vector<1x128xi32>
    %159 = vector.extract_strided_slice %17 {offsets = [0, 1], sizes = [16, 1], strides = [1, 1]} : vector<16x3xf32> to vector<16x1xf32>
    %cst_53 = arith.constant 0.000000e+00 : f32
    %160 = vector.shape_cast %158 : vector<1x128xi1> to vector<1x128xi1>
    %161 = vector.broadcast %160 : vector<1x128xi1> to vector<16x128xi1>
    %162 = vector.shape_cast %159 : vector<16x1xf32> to vector<16x1xf32>
    %163 = vector.broadcast %162 : vector<16x1xf32> to vector<16x128xf32>
    %164 = vector.broadcast %cst_53 : f32 to vector<16x128xf32>
    %165 = arith.select %161, %163, %164 : vector<16x128xi1>, vector<16x128xf32>
    %166 = arith.addf %156, %165 : vector<16x128xf32>
    %c9_i32 = arith.constant 9 : i32
    %167 = vector.broadcast %c9_i32 : i32 to vector<1x128xi32>
    %168 = arith.cmpi eq, %19, %167 : vector<1x128xi32>
    %cst_54 = arith.constant 0.000000e+00 : f32
    %169 = vector.shape_cast %168 : vector<1x128xi1> to vector<1x128xi1>
    %170 = vector.broadcast %169 : vector<1x128xi1> to vector<16x128xi1>
    %171 = vector.shape_cast %96 : vector<16x1xf32> to vector<16x1xf32>
    %172 = vector.broadcast %171 : vector<16x1xf32> to vector<16x128xf32>
    %173 = vector.broadcast %cst_54 : f32 to vector<16x128xf32>
    %174 = arith.select %170, %172, %173 : vector<16x128xi1>, vector<16x128xf32>
    %175 = arith.addf %166, %174 : vector<16x128xf32>
    %c2_i32 = arith.constant 2 : i32
    %176 = vector.broadcast %c2_i32 : i32 to vector<1x128xi32>
    %177 = arith.cmpi eq, %19, %176 : vector<1x128xi32>
    %178 = vector.extract_strided_slice %17 {offsets = [0, 2], sizes = [16, 1], strides = [1, 1]} : vector<16x3xf32> to vector<16x1xf32>
    %cst_55 = arith.constant 0.000000e+00 : f32
    %179 = vector.shape_cast %177 : vector<1x128xi1> to vector<1x128xi1>
    %180 = vector.broadcast %179 : vector<1x128xi1> to vector<16x128xi1>
    %181 = vector.shape_cast %178 : vector<16x1xf32> to vector<16x1xf32>
    %182 = vector.broadcast %181 : vector<16x1xf32> to vector<16x128xf32>
    %183 = vector.broadcast %cst_55 : f32 to vector<16x128xf32>
    %184 = arith.select %180, %182, %183 : vector<16x128xi1>, vector<16x128xf32>
    %185 = arith.addf %175, %184 : vector<16x128xf32>
    %c10_i32 = arith.constant 10 : i32
    %186 = vector.broadcast %c10_i32 : i32 to vector<1x128xi32>
    %187 = arith.cmpi eq, %19, %186 : vector<1x128xi32>
    %cst_56 = arith.constant 0.000000e+00 : f32
    %188 = vector.shape_cast %187 : vector<1x128xi1> to vector<1x128xi1>
    %189 = vector.broadcast %188 : vector<1x128xi1> to vector<16x128xi1>
    %190 = vector.shape_cast %101 : vector<16x1xf32> to vector<16x1xf32>
    %191 = vector.broadcast %190 : vector<16x1xf32> to vector<16x128xf32>
    %192 = vector.broadcast %cst_56 : f32 to vector<16x128xf32>
    %193 = arith.select %189, %191, %192 : vector<16x128xi1>, vector<16x128xf32>
    %194 = arith.addf %185, %193 : vector<16x128xf32>
    %195 = arith.truncf %194 : vector<16x128xf32> to vector<16x128xbf16>
    %c0_57 = arith.constant 0 : index
    %c0_58 = arith.constant 0 : index
    %196 = vector.load %arg15[%c0_57, %c0_58] : memref<16x128xbf16, #tpu.memory_space<vmem>>, vector<16x128xbf16>
    tpu.vector_store %arg15[%c0_57, %c0_58], %195 {strides = array<i32>} : memref<16x128xbf16, #tpu.memory_space<vmem>>, vector<16x128xbf16>,
    return
  }
  func.func @transform_0(%arg0: i32) -> (i32, i32) {
    %c0_i32 = arith.constant 0 : i32
    %c0_i32_0 = arith.constant 0 : i32
    return %arg0, %c0_i32 : i32, i32
  }
  func.func @transform_1(%arg0: i32) -> (i32, i32) {
    %c0_i32 = arith.constant 0 : i32
    %c0_i32_0 = arith.constant 0 : i32
    return %arg0, %c0_i32 : i32, i32
  }
  func.func @transform_2(%arg0: i32) -> (i32, i32) {
    %c0_i32 = arith.constant 0 : i32
    %c0_i32_0 = arith.constant 0 : i32
    %c0_i32_1 = arith.constant 0 : i32
    return %c0_i32, %c0_i32_0 : i32, i32
  }
  func.func @transform_3(%arg0: i32) -> (i32, i32) {
    %c0_i32 = arith.constant 0 : i32
    %c0_i32_0 = arith.constant 0 : i32
    %c0_i32_1 = arith.constant 0 : i32
    return %c0_i32, %c0_i32_0 : i32, i32
  }
  func.func @transform_4(%arg0: i32) -> (i32, i32) {
    %c0_i32 = arith.constant 0 : i32
    %c0_i32_0 = arith.constant 0 : i32
    %c0_i32_1 = arith.constant 0 : i32
    return %c0_i32, %c0_i32_0 : i32, i32
  }
  func.func @transform_5(%arg0: i32) -> (i32, i32) {
    %c0_i32 = arith.constant 0 : i32
    %c0_i32_0 = arith.constant 0 : i32
    %c0_i32_1 = arith.constant 0 : i32
    return %c0_i32, %c0_i32_0 : i32, i32
  }
  func.func @transform_6(%arg0: i32) -> (i32, i32) {
    %c0_i32 = arith.constant 0 : i32
    %c0_i32_0 = arith.constant 0 : i32
    %c0_i32_1 = arith.constant 0 : i32
    return %c0_i32, %c0_i32_0 : i32, i32
  }
  func.func @transform_7(%arg0: i32) -> (i32, i32) {
    %c0_i32 = arith.constant 0 : i32
    %c0_i32_0 = arith.constant 0 : i32
    %c0_i32_1 = arith.constant 0 : i32
    return %c0_i32, %c0_i32_0 : i32, i32
  }
  func.func @transform_8(%arg0: i32) -> (i32, i32) {
    %c0_i32 = arith.constant 0 : i32
    %c0_i32_0 = arith.constant 0 : i32
    %c0_i32_1 = arith.constant 0 : i32
    return %c0_i32, %c0_i32_0 : i32, i32
  }
  func.func @transform_9(%arg0: i32) -> (i32, i32) {
    %c0_i32 = arith.constant 0 : i32
    %c0_i32_0 = arith.constant 0 : i32
    %c0_i32_1 = arith.constant 0 : i32
    return %c0_i32, %c0_i32_0 : i32, i32
  }
  func.func @transform_10(%arg0: i32) -> (i32, i32) {
    %c0_i32 = arith.constant 0 : i32
    %c0_i32_0 = arith.constant 0 : i32
    %c0_i32_1 = arith.constant 0 : i32
    return %c0_i32, %c0_i32_0 : i32, i32
  }
  func.func @transform_11(%arg0: i32) -> (i32, i32) {
    %c0_i32 = arith.constant 0 : i32
    %c0_i32_0 = arith.constant 0 : i32
    %c0_i32_1 = arith.constant 0 : i32
    return %c0_i32, %c0_i32_0 : i32, i32
  }
  func.func @transform_12(%arg0: i32) -> (i32, i32) {
    %c0_i32 = arith.constant 0 : i32
    %c0_i32_0 = arith.constant 0 : i32
    %c0_i32_1 = arith.constant 0 : i32
    return %c0_i32, %c0_i32_0 : i32, i32
  }
  func.func @transform_13(%arg0: i32) -> (i32, i32) {
    %c0_i32 = arith.constant 0 : i32
    %c0_i32_0 = arith.constant 0 : i32
    return %arg0, %c0_i32 : i32, i32
  }
  func.func @transform_14(%arg0: i32) -> (i32, i32) {
    %c0_i32 = arith.constant 0 : i32
    %c0_i32_0 = arith.constant 0 : i32
    return %arg0, %c0_i32 : i32, i32
  }
}

</mosaic_0001>

<llo_original>
// kernel: tpu_custom_call.1
$region0: #{tpu_custom_call.1}
  #allocation0 [shape = 'u32[]', space=smem, size = 0x4, offset = 0x4, fixed_abs, tag = 'smem constant byte address 0x4 - core index']
  #allocation1 [shape = 'u32[144,128]{1,0:T(1,128)}', space=vmem, size = 0x12000, scoped, tag = 'internal scratch']
  %s0 = inlined_call_operand.vmem [shape: bf16[32,256], index: 0, kind: input, shape index: {}]
  %s1 = inlined_call_operand.vmem [shape: bf16[32,16], index: 1, kind: input, shape index: {}]
  %s2 = inlined_call_operand.hbm [shape: bf16[256,256], index: 2, kind: input, shape index: {}]
  %s3 = inlined_call_operand.vmem [shape: bf16[16,256], index: 3, kind: input, shape index: {}]
  %s4 = inlined_call_operand.vmem [shape: f32[1,256], index: 4, kind: input, shape index: {}]
  %s5 = inlined_call_operand.vmem [shape: bf16[256,3], index: 5, kind: input, shape index: {}]
  %s6 = inlined_call_operand.vmem [shape: f32[1,3], index: 6, kind: input, shape index: {}]
  %s7 = inlined_call_operand.vmem [shape: f32[3,128], index: 7, kind: input, shape index: {}]
  %s8 = inlined_call_operand.vmem [shape: f32[3,128], index: 8, kind: input, shape index: {}]
  %s9 = inlined_call_operand.vmem [shape: bf16[16,128], index: 9, kind: input, shape index: {}]
  %s10 = inlined_call_operand.hbm [shape: f32[1,128], index: 10, kind: input, shape index: {}]
  %s11 = inlined_call_operand.vmem [shape: bf16[128,256], index: 11, kind: input, shape index: {}]
  %s12 = inlined_call_operand.vmem [shape: f32[1,256], index: 12, kind: input, shape index: {}]
  %s13 = inlined_call_operand.hbm [shape: bf16[32,256], index: 13, kind: output, shape index: {0}]
  %s14 = inlined_call_operand.hbm [shape: bf16[32,128], index: 14, kind: output, shape index: {1}]
  %15 = xla_tuple %s13, %s14
  %s16 = sld [smem:[#allocation0]]
  $region101: #{tpu_custom_call.1} parent=0
    _
  %s18 = ssub.s32 1, %s16
  %s19 = scalar_select 0, %s18, %s16
  $region1: #{tpu_custom_call.1} parent=0
    #allocation2 [shape = 'u8[131072]{0}', space=vmem, size = 0x20000, scoped, tag = 'input window, operand 2, single buffered']
    #allocation3 [shape = 's32[2]{0}', space=sflag, size = 0x8, scoped, tag = 'scoped memory for tpu_custom_call.1']
    #allocation4 [shape = 's32[2]{0}', space=sflag, size = 0x8, scoped, tag = 'scoped memory for tpu_custom_call.1']
    #allocation5 [shape = 'u8[512]{0}', space=vmem, size = 0x400, scoped, tag = 'input window, operand 10, single buffered']
    #allocation6 [shape = 's32[1]{0}', space=sflag, size = 0x4, scoped, tag = 'scoped memory for tpu_custom_call.1']
    #allocation7 [shape = 'u8[16384]{0}', space=vmem, size = 0x4000, scoped, tag = 'output window, operand 0']
    #allocation8 [shape = 'u8[8192]{0}', space=vmem, size = 0x2000, scoped, tag = 'output window, operand 1']
    #allocation9 [shape = 's32[2]{0}', space=sflag, size = 0x8, scoped, tag = 'scoped memory for tpu_custom_call.1']
    %20 = vsyncpa [#allocation3], 0
    %21 = vsyncpa [#allocation6], 0
    %22 = vsyncpa [#allocation4], 0
    %s23 = scalar_lea.sflag [#allocation4], 1
    %24 = vsyncpa %s23, 0
    %25 = vsyncpa [#allocation9], 0
    %s26 = scalar_lea.sflag [#allocation9], 1
    %27 = vsyncpa %s26, 0
    loop: start=0, step=1, limit=4
    $region2: #{tpu_custom_call.1} parent=1 // loop_pre_header
      _
    $region3: #{tpu_custom_call.1} parent=1 // loop_header
      %s29 = sphi 0, %s33
      %p30 = scmp.ge.s32.totalorder %s29, 4
      %s39 = sphi 0, %s41
      %s42 = sphi 0, %s39
      %s43 = sphi 0, %s42
      %s59 = sphi 0, %s43
      %s65 = sphi 0, %s67
      %s68 = sphi 0, %s65
      %s69 = sphi 0, %s68
      %s85 = sphi 0, %s69
      %s89 = sphi 0, %s89
      %s91 = sphi 0, %s89
      %s92 = sphi 0, %s91
      %s106 = sphi 0, %s92
      %s110 = sphi 0, %s110
      %s112 = sphi 0, %s110
      %s113 = sphi 0, %s112
      %s127 = sphi 0, %s113
      %s131 = sphi 0, %s131
      %s133 = sphi 0, %s131
      %s134 = sphi 0, %s133
      %s148 = sphi 0, %s134
      %s152 = sphi 0, %s152
      %s154 = sphi 0, %s152
      %s155 = sphi 0, %s154
      %s169 = sphi 0, %s155
      %s173 = sphi 0, %s173
      %s175 = sphi 0, %s173
      %s176 = sphi 0, %s175
      %s190 = sphi 0, %s176
      %s194 = sphi 0, %s194
      %s196 = sphi 0, %s194
      %s197 = sphi 0, %s196
      %s211 = sphi 0, %s197
      %s215 = sphi 0, %s215
      %s217 = sphi 0, %s215
      %s218 = sphi 0, %s217
      %s232 = sphi 0, %s218
      %s236 = sphi 0, %s236
      %s238 = sphi 0, %s236
      %s239 = sphi 0, %s238
      %s253 = sphi 0, %s239
      %s257 = sphi 0, %s257
      %s259 = sphi 0, %s257
      %s260 = sphi 0, %s259
      %s274 = sphi 0, %s260
      %s278 = sphi 0, %s278
      %s280 = sphi 0, %s278
      %s281 = sphi 0, %s280
      %s295 = sphi 0, %s281
      %s299 = sphi 0, %s299
      %s301 = sphi 0, %s299
      %s302 = sphi 0, %s301
      %s316 = sphi 0, %s302
      %s322 = sphi 0, %s324
      %s325 = sphi 0, %s322
      %s326 = sphi 0, %s325
      %s342 = sphi 0, %s326
      %s348 = sphi 0, %s350
      %s351 = sphi 0, %s348
      %s352 = sphi 0, %s351
      %s368 = sphi 0, %s352
    $region4: #{tpu_custom_call.1} parent=1 // loop_header_branch
      %32 = sbr.rel (%p30) target = $region8
    $region5: #{tpu_custom_call.1} parent=1 // loop_body
      %s34 = ssub.s32 %s29, 1
      %s35 = ssub.s32 %s29, 2
      %s36 = sadd.s32 %s29, 1
      %s37 = ssub.s32 %s29, %s36
      %p38 = scmp.eq.s32.totalorder %s37, 0
      %s40 = sadd.s32 %s39, 1
      %s41 = scalar_select %p38, %s39, %s40
      %p44 = pneg %p38
      %p45 = scmp.eq.s32.totalorder %s29, 1
      %p46 = por %p44, %p45
      %p47 = scmp.ne.s32.totalorder %s39, %s42
      %p48 = scmp.eq.s32.totalorder %s29, 0
      %p49 = por %p47, %p48
      %p50 = scmp.ne.s32.totalorder %s39, %s42
      %p51 = scmp.eq.s32.totalorder %s34, 1
      %p52 = por %p50, %p51
      %p53 = scmp.ne.s32.totalorder %s42, %s43
      %p54 = scmp.eq.s32.totalorder %s34, 0
      %p55 = por %p53, %p54
      %p56 = scmp.ne.s32.totalorder %s42, %s43
      %p57 = scmp.eq.s32.totalorder %s35, 1
      %p58 = por %p56, %p57
      %p60 = scmp.ne.s32.totalorder %s43, %s59
      %p61 = scmp.eq.s32.totalorder %s35, 0
      %p62 = por %p60, %p61
      %s63 = ssub.s32 %s29, %s36
      %p64 = scmp.eq.s32.totalorder %s63, 0
      %s66 = sadd.s32 %s65, 1
      %s67 = scalar_select %p64, %s65, %s66
      %p70 = pneg %p64
      %p71 = scmp.eq.s32.totalorder %s29, 1
      %p72 = por %p70, %p71
      %p73 = scmp.ne.s32.totalorder %s65, %s68
      %p74 = scmp.eq.s32.totalorder %s29, 0
      %p75 = por %p73, %p74
      %p76 = scmp.ne.s32.totalorder %s65, %s68
      %p77 = scmp.eq.s32.totalorder %s34, 1
      %p78 = por %p76, %p77
      %p79 = scmp.ne.s32.totalorder %s68, %s69
      %p80 = scmp.eq.s32.totalorder %s34, 0
      %p81 = por %p79, %p80
      %p82 = scmp.ne.s32.totalorder %s68, %s69
      %p83 = scmp.eq.s32.totalorder %s35, 1
      %p84 = por %p82, %p83
      %p86 = scmp.ne.s32.totalorder %s69, %s85
      %p87 = scmp.eq.s32.totalorder %s35, 0
      %p88 = por %p86, %p87
      %s90 = sadd.s32 %s89, 1
      %p93 = scmp.eq.s32.totalorder %s29, 1
      %p94 = scmp.ne.s32.totalorder %s89, %s91
      %p95 = scmp.eq.s32.totalorder %s29, 0
      %p96 = por %p94, %p95
      %p97 = scmp.ne.s32.totalorder %s89, %s91
      %p98 = scmp.eq.s32.totalorder %s34, 1
      %p99 = por %p97, %p98
      %p100 = scmp.ne.s32.totalorder %s91, %s92
      %p101 = scmp.eq.s32.totalorder %s34, 0
      %p102 = por %p100, %p101
      %p103 = scmp.ne.s32.totalorder %s91, %s92
      %p104 = scmp.eq.s32.totalorder %s35, 1
      %p105 = por %p103, %p104
      %p107 = scmp.ne.s32.totalorder %s92, %s106
      %p108 = scmp.eq.s32.totalorder %s35, 0
      %p109 = por %p107, %p108
      %s111 = sadd.s32 %s110, 1
      %p114 = scmp.eq.s32.totalorder %s29, 1
      %p115 = scmp.ne.s32.totalorder %s110, %s112
      %p116 = scmp.eq.s32.totalorder %s29, 0
      %p117 = por %p115, %p116
      %p118 = scmp.ne.s32.totalorder %s110, %s112
      %p119 = scmp.eq.s32.totalorder %s34, 1
      %p120 = por %p118, %p119
      %p121 = scmp.ne.s32.totalorder %s112, %s113
      %p122 = scmp.eq.s32.totalorder %s34, 0
      %p123 = por %p121, %p122
      %p124 = scmp.ne.s32.totalorder %s112, %s113
      %p125 = scmp.eq.s32.totalorder %s35, 1
      %p126 = por %p124, %p125
      %p128 = scmp.ne.s32.totalorder %s113, %s127
      %p129 = scmp.eq.s32.totalorder %s35, 0
      %p130 = por %p128, %p129
      %s132 = sadd.s32 %s131, 1
      %p135 = scmp.eq.s32.totalorder %s29, 1
      %p136 = scmp.ne.s32.totalorder %s131, %s133
      %p137 = scmp.eq.s32.totalorder %s29, 0
      %p138 = por %p136, %p137
      %p139 = scmp.ne.s32.totalorder %s131, %s133
      %p140 = scmp.eq.s32.totalorder %s34, 1
      %p141 = por %p139, %p140
      %p142 = scmp.ne.s32.totalorder %s133, %s134
      %p143 = scmp.eq.s32.totalorder %s34, 0
      %p144 = por %p142, %p143
      %p145 = scmp.ne.s32.totalorder %s133, %s134
      %p146 = scmp.eq.s32.totalorder %s35, 1
      %p147 = por %p145, %p146
      %p149 = scmp.ne.s32.totalorder %s134, %s148
      %p150 = scmp.eq.s32.totalorder %s35, 0
      %p151 = por %p149, %p150
      %s153 = sadd.s32 %s152, 1
      %p156 = scmp.eq.s32.totalorder %s29, 1
      %p157 = scmp.ne.s32.totalorder %s152, %s154
      %p158 = scmp.eq.s32.totalorder %s29, 0
      %p159 = por %p157, %p158
      %p160 = scmp.ne.s32.totalorder %s152, %s154
      %p161 = scmp.eq.s32.totalorder %s34, 1
      %p162 = por %p160, %p161
      %p163 = scmp.ne.s32.totalorder %s154, %s155
      %p164 = scmp.eq.s32.totalorder %s34, 0
      %p165 = por %p163, %p164
      %p166 = scmp.ne.s32.totalorder %s154, %s155
      %p167 = scmp.eq.s32.totalorder %s35, 1
      %p168 = por %p166, %p167
      %p170 = scmp.ne.s32.totalorder %s155, %s169
      %p171 = scmp.eq.s32.totalorder %s35, 0
      %p172 = por %p170, %p171
      %s174 = sadd.s32 %s173, 1
      %p177 = scmp.eq.s32.totalorder %s29, 1
      %p178 = scmp.ne.s32.totalorder %s173, %s175
      %p179 = scmp.eq.s32.totalorder %s29, 0
      %p180 = por %p178, %p179
      %p181 = scmp.ne.s32.totalorder %s173, %s175
      %p182 = scmp.eq.s32.totalorder %s34, 1
      %p183 = por %p181, %p182
      %p184 = scmp.ne.s32.totalorder %s175, %s176
      %p185 = scmp.eq.s32.totalorder %s34, 0
      %p186 = por %p184, %p185
      %p187 = scmp.ne.s32.totalorder %s175, %s176
      %p188 = scmp.eq.s32.totalorder %s35, 1
      %p189 = por %p187, %p188
      %p191 = scmp.ne.s32.totalorder %s176, %s190
      %p192 = scmp.eq.s32.totalorder %s35, 0
      %p193 = por %p191, %p192
      %s195 = sadd.s32 %s194, 1
      %p198 = scmp.eq.s32.totalorder %s29, 1
      %p199 = scmp.ne.s32.totalorder %s194, %s196
      %p200 = scmp.eq.s32.totalorder %s29, 0
      %p201 = por %p199, %p200
      %p202 = scmp.ne.s32.totalorder %s194, %s196
      %p203 = scmp.eq.s32.totalorder %s34, 1
      %p204 = por %p202, %p203
      %p205 = scmp.ne.s32.totalorder %s196, %s197
      %p206 = scmp.eq.s32.totalorder %s34, 0
      %p207 = por %p205, %p206
      %p208 = scmp.ne.s32.totalorder %s196, %s197
      %p209 = scmp.eq.s32.totalorder %s35, 1
      %p210 = por %p208, %p209
      %p212 = scmp.ne.s32.totalorder %s197, %s211
      %p213 = scmp.eq.s32.totalorder %s35, 0
      %p214 = por %p212, %p213
      %s216 = sadd.s32 %s215, 1
      %p219 = scmp.eq.s32.totalorder %s29, 1
      %p220 = scmp.ne.s32.totalorder %s215, %s217
      %p221 = scmp.eq.s32.totalorder %s29, 0
      %p222 = por %p220, %p221
      %p223 = scmp.ne.s32.totalorder %s215, %s217
      %p224 = scmp.eq.s32.totalorder %s34, 1
      %p225 = por %p223, %p224
      %p226 = scmp.ne.s32.totalorder %s217, %s218
      %p227 = scmp.eq.s32.totalorder %s34, 0
      %p228 = por %p226, %p227
      %p229 = scmp.ne.s32.totalorder %s217, %s218
      %p230 = scmp.eq.s32.totalorder %s35, 1
      %p231 = por %p229, %p230
      %p233 = scmp.ne.s32.totalorder %s218, %s232
      %p234 = scmp.eq.s32.totalorder %s35, 0
      %p235 = por %p233, %p234
      %s237 = sadd.s32 %s236, 1
      %p240 = scmp.eq.s32.totalorder %s29, 1
      %p241 = scmp.ne.s32.totalorder %s236, %s238
      %p242 = scmp.eq.s32.totalorder %s29, 0
      %p243 = por %p241, %p242
      %p244 = scmp.ne.s32.totalorder %s236, %s238
      %p245 = scmp.eq.s32.totalorder %s34, 1
      %p246 = por %p244, %p245
      %p247 = scmp.ne.s32.totalorder %s238, %s239
      %p248 = scmp.eq.s32.totalorder %s34, 0
      %p249 = por %p247, %p248
      %p250 = scmp.ne.s32.totalorder %s238, %s239
      %p251 = scmp.eq.s32.totalorder %s35, 1
      %p252 = por %p250, %p251
      %p254 = scmp.ne.s32.totalorder %s239, %s253
      %p255 = scmp.eq.s32.totalorder %s35, 0
      %p256 = por %p254, %p255
      %s258 = sadd.s32 %s257, 1
      %p261 = scmp.eq.s32.totalorder %s29, 1
      %p262 = scmp.ne.s32.totalorder %s257, %s259
      %p263 = scmp.eq.s32.totalorder %s29, 0
      %p264 = por %p262, %p263
      %p265 = scmp.ne.s32.totalorder %s257, %s259
      %p266 = scmp.eq.s32.totalorder %s34, 1
      %p267 = por %p265, %p266
      %p268 = scmp.ne.s32.totalorder %s259, %s260
      %p269 = scmp.eq.s32.totalorder %s34, 0
      %p270 = por %p268, %p269
      %p271 = scmp.ne.s32.totalorder %s259, %s260
      %p272 = scmp.eq.s32.totalorder %s35, 1
      %p273 = por %p271, %p272
      %p275 = scmp.ne.s32.totalorder %s260, %s274
      %p276 = scmp.eq.s32.totalorder %s35, 0
      %p277 = por %p275, %p276
      %s279 = sadd.s32 %s278, 1
      %p282 = scmp.eq.s32.totalorder %s29, 1
      %p283 = scmp.ne.s32.totalorder %s278, %s280
      %p284 = scmp.eq.s32.totalorder %s29, 0
      %p285 = por %p283, %p284
      %p286 = scmp.ne.s32.totalorder %s278, %s280
      %p287 = scmp.eq.s32.totalorder %s34, 1
      %p288 = por %p286, %p287
      %p289 = scmp.ne.s32.totalorder %s280, %s281
      %p290 = scmp.eq.s32.totalorder %s34, 0
      %p291 = por %p289, %p290
      %p292 = scmp.ne.s32.totalorder %s280, %s281
      %p293 = scmp.eq.s32.totalorder %s35, 1
      %p294 = por %p292, %p293
      %p296 = scmp.ne.s32.totalorder %s281, %s295
      %p297 = scmp.eq.s32.totalorder %s35, 0
      %p298 = por %p296, %p297
      %s300 = sadd.s32 %s299, 1
      %p303 = scmp.eq.s32.totalorder %s29, 1
      %p304 = scmp.ne.s32.totalorder %s299, %s301
      %p305 = scmp.eq.s32.totalorder %s29, 0
      %p306 = por %p304, %p305
      %p307 = scmp.ne.s32.totalorder %s299, %s301
      %p308 = scmp.eq.s32.totalorder %s34, 1
      %p309 = por %p307, %p308
      %p310 = scmp.ne.s32.totalorder %s301, %s302
      %p311 = scmp.eq.s32.totalorder %s34, 0
      %p312 = por %p310, %p311
      %p313 = scmp.ne.s32.totalorder %s301, %s302
      %p314 = scmp.eq.s32.totalorder %s35, 1
      %p315 = por %p313, %p314
      %p317 = scmp.ne.s32.totalorder %s302, %s316
      %p318 = scmp.eq.s32.totalorder %s35, 0
      %p319 = por %p317, %p318
      %s320 = ssub.s32 %s29, %s36
      %p321 = scmp.eq.s32.totalorder %s320, 0
      %s323 = sadd.s32 %s322, 1
      %s324 = scalar_select %p321, %s322, %s323
      %p327 = pneg %p321
      %p328 = scmp.eq.s32.totalorder %s29, 1
      %p329 = por %p327, %p328
      %p330 = scmp.ne.s32.totalorder %s322, %s325
      %p331 = scmp.eq.s32.totalorder %s29, 0
      %p332 = por %p330, %p331
      %p333 = scmp.ne.s32.totalorder %s322, %s325
      %p334 = scmp.eq.s32.totalorder %s34, 1
      %p335 = por %p333, %p334
      %p336 = scmp.ne.s32.totalorder %s325, %s326
      %p337 = scmp.eq.s32.totalorder %s34, 0
      %p338 = por %p336, %p337
      %p339 = scmp.ne.s32.totalorder %s325, %s326
      %p340 = scmp.eq.s32.totalorder %s35, 1
      %p341 = por %p339, %p340
      %p343 = scmp.ne.s32.totalorder %s326, %s342
      %p344 = scmp.eq.s32.totalorder %s35, 0
      %p345 = por %p343, %p344
      %s346 = ssub.s32 %s29, %s36
      %p347 = scmp.eq.s32.totalorder %s346, 0
      %s349 = sadd.s32 %s348, 1
      %s350 = scalar_select %p347, %s348, %s349
      %p353 = pneg %p347
      %p354 = scmp.eq.s32.totalorder %s29, 1
      %p355 = por %p353, %p354
      %p356 = scmp.ne.s32.totalorder %s348, %s351
      %p357 = scmp.eq.s32.totalorder %s29, 0
      %p358 = por %p356, %p357
      %p359 = scmp.ne.s32.totalorder %s348, %s351
      %p360 = scmp.eq.s32.totalorder %s34, 1
      %p361 = por %p359, %p360
      %p362 = scmp.ne.s32.totalorder %s351, %s352
      %p363 = scmp.eq.s32.totalorder %s34, 0
      %p364 = por %p362, %p363
      %p365 = scmp.ne.s32.totalorder %s351, %s352
      %p366 = scmp.eq.s32.totalorder %s35, 1
      %p367 = por %p365, %p366
      %p369 = scmp.ne.s32.totalorder %s352, %s368
      %p370 = scmp.eq.s32.totalorder %s35, 0
      %p371 = por %p369, %p370
      %p372 = scmp.le.s32.totalorder 1, %s29
      %p373 = scmp.lt.s32.totalorder %s29, 3
      %p374 = pnand %p372, %p373
      %p375 = pneg %p374
      // Predicated region
      $region9: #{tpu_custom_call.1} parent=5 // pred_check
        _
      $region10: #{tpu_custom_call.1} parent=5 // pred_check_branch
        %377 = sbr.rel (%p374) target = $region12
      $region11: #{tpu_custom_call.1} parent=5 // pred_region
        %s378 = ssub.s32 %s29, 1
        // Predicated region
        $region13: #{tpu_custom_call.1} parent=11 // pred_check
          %p379 = pneg %p102
        $region14: #{tpu_custom_call.1} parent=11 // pred_check_branch
          %381 = sbr.rel (%p379) target = $region16
        $region15: #{tpu_custom_call.1} parent=11 // pred_region
          %s383 = ssub.s32 4096, 4096
          %384 = vsyncadd [#allocation3], %s383
          %s385 = sshll.u32 [#allocation2], 4
          %s386 = int_to_ptr.vmem [resolvable:$true] %s385
          %391 = dma.hbm_to_vmem [thread:$0]  %s2, 4096, %s386, [#allocation3], 128, 128, 8
        $region16: #{tpu_custom_call.1} parent=11 // pred_fallthru
          _
        // Predicated region
        $region17: #{tpu_custom_call.1} parent=11 // pred_check
          %p392 = pneg %p123
        $region18: #{tpu_custom_call.1} parent=11 // pred_check_branch
          %394 = sbr.rel (%p392) target = $region20
        $region19: #{tpu_custom_call.1} parent=11 // pred_region
          _
        $region20: #{tpu_custom_call.1} parent=11 // pred_fallthru
          _
        // Predicated region
        $region21: #{tpu_custom_call.1} parent=11 // pred_check
          %p395 = pneg %p144
        $region22: #{tpu_custom_call.1} parent=11 // pred_check_branch
          %397 = sbr.rel (%p395) target = $region24
        $region23: #{tpu_custom_call.1} parent=11 // pred_region
          _
        $region24: #{tpu_custom_call.1} parent=11 // pred_fallthru
          _
        // Predicated region
        $region25: #{tpu_custom_call.1} parent=11 // pred_check
          %p398 = pneg %p165
        $region26: #{tpu_custom_call.1} parent=11 // pred_check_branch
          %400 = sbr.rel (%p398) target = $region28
        $region27: #{tpu_custom_call.1} parent=11 // pred_region
          _
        $region28: #{tpu_custom_call.1} parent=11 // pred_fallthru
          _
        // Predicated region
        $region29: #{tpu_custom_call.1} parent=11 // pred_check
          %p401 = pneg %p186
        $region30: #{tpu_custom_call.1} parent=11 // pred_check_branch
          %403 = sbr.rel (%p401) target = $region32
        $region31: #{tpu_custom_call.1} parent=11 // pred_region
          _
        $region32: #{tpu_custom_call.1} parent=11 // pred_fallthru
          _
        // Predicated region
        $region33: #{tpu_custom_call.1} parent=11 // pred_check
          %p404 = pneg %p207
        $region34: #{tpu_custom_call.1} parent=11 // pred_check_branch
          %406 = sbr.rel (%p404) target = $region36
        $region35: #{tpu_custom_call.1} parent=11 // pred_region
          _
        $region36: #{tpu_custom_call.1} parent=11 // pred_fallthru
          _
        // Predicated region
        $region37: #{tpu_custom_call.1} parent=11 // pred_check
          %p407 = pneg %p228
        $region38: #{tpu_custom_call.1} parent=11 // pred_check_branch
          %409 = sbr.rel (%p407) target = $region40
        $region39: #{tpu_custom_call.1} parent=11 // pred_region
          _
        $region40: #{tpu_custom_call.1} parent=11 // pred_fallthru
          _
        // Predicated region
        $region41: #{tpu_custom_call.1} parent=11 // pred_check
          %p410 = pneg %p249
        $region42: #{tpu_custom_call.1} parent=11 // pred_check_branch
          %412 = sbr.rel (%p410) target = $region44
        $region43: #{tpu_custom_call.1} parent=11 // pred_region
          _
        $region44: #{tpu_custom_call.1} parent=11 // pred_fallthru
          _
        // Predicated region
        $region45: #{tpu_custom_call.1} parent=11 // pred_check
          %p413 = pneg %p270
        $region46: #{tpu_custom_call.1} parent=11 // pred_check_branch
          %415 = sbr.rel (%p413) target = $region48
        $region47: #{tpu_custom_call.1} parent=11 // pred_region
          %s417 = ssub.s32 16, 16
          %418 = vsyncadd [#allocation6], %s417
          %s420 = sshll.u32 [#allocation5], 4
          %s421 = int_to_ptr.vmem [resolvable:$true] %s420
          %423 = dma.hbm_to_vmem [thread:$0]  %s10, 16, %s421, [#allocation6]
        $region48: #{tpu_custom_call.1} parent=11 // pred_fallthru
          _
        // Predicated region
        $region49: #{tpu_custom_call.1} parent=11 // pred_check
          %p424 = pneg %p291
        $region50: #{tpu_custom_call.1} parent=11 // pred_check_branch
          %426 = sbr.rel (%p424) target = $region52
        $region51: #{tpu_custom_call.1} parent=11 // pred_region
          _
        $region52: #{tpu_custom_call.1} parent=11 // pred_fallthru
          _
        // Predicated region
        $region53: #{tpu_custom_call.1} parent=11 // pred_check
          %p427 = pneg %p312
        $region54: #{tpu_custom_call.1} parent=11 // pred_check_branch
          %429 = sbr.rel (%p427) target = $region56
        $region55: #{tpu_custom_call.1} parent=11 // pred_region
          _
        $region56: #{tpu_custom_call.1} parent=11 // pred_fallthru
          _
      $region12: #{tpu_custom_call.1} parent=5 // pred_fallthru
        _
      %p430 = scmp.lt.s32.totalorder %s29, 2
      // Predicated region
      $region57: #{tpu_custom_call.1} parent=5 // pred_check
        %p431 = pneg %p430
      $region58: #{tpu_custom_call.1} parent=5 // pred_check_branch
        %433 = sbr.rel (%p431) target = $region60
      $region59: #{tpu_custom_call.1} parent=5 // pred_region
        // Predicated region
        $region61: #{tpu_custom_call.1} parent=59 // pred_check
          %p434 = pneg %p49
        $region62: #{tpu_custom_call.1} parent=59 // pred_check_branch
          %436 = sbr.rel (%p434) target = $region64
        $region63: #{tpu_custom_call.1} parent=59 // pred_region
          %s437 = smul.u32 2, %s29
          %p438 = scmp.lt.s32.totalorder %s437, 3
          %s439 = scalar_select %p438, %s437, 3
          %s440 = smul.addr %s439, 2
          %s441 = smul.addr %s440, 4
          %s442 = scalar_lea.vmem %s0, %s441
          %s443 = smul.u32 2, %s29
        $region64: #{tpu_custom_call.1} parent=59 // pred_fallthru
          _
        // Predicated region
        $region65: #{tpu_custom_call.1} parent=59 // pred_check
          %p444 = pneg %p75
        $region66: #{tpu_custom_call.1} parent=59 // pred_check_branch
          %446 = sbr.rel (%p444) target = $region68
        $region67: #{tpu_custom_call.1} parent=59 // pred_region
          %s447 = smul.u32 2, %s29
          %p448 = scmp.lt.s32.totalorder %s447, 3
          %s449 = scalar_select %p448, %s447, 3
          %s450 = smul.addr %s449, 4
          %s451 = scalar_lea.vmem %s1, %s450
          %s452 = smul.u32 2, %s29
        $region68: #{tpu_custom_call.1} parent=59 // pred_fallthru
          _
      $region60: #{tpu_custom_call.1} parent=5 // pred_fallthru
        _
      %p453 = scmp.le.s32.totalorder 1, %s29
      %p454 = scmp.lt.s32.totalorder %s29, 3
      %p455 = pnand %p453, %p454
      %p456 = pneg %p455
      // Predicated region
      $region69: #{tpu_custom_call.1} parent=5 // pred_check
        _
      $region70: #{tpu_custom_call.1} parent=5 // pred_check_branch
        %458 = sbr.rel (%p455) target = $region72
      $region71: #{tpu_custom_call.1} parent=5 // pred_region
        %s459 = ssub.s32 %s29, 1
        // Predicated region
        $region73: #{tpu_custom_call.1} parent=71 // pred_check
          %p460 = pneg %p102
        $region74: #{tpu_custom_call.1} parent=71 // pred_check_branch
          %462 = sbr.rel (%p460) target = $region76
        $region75: #{tpu_custom_call.1} parent=71 // pred_region
          %463 = dma.done [#allocation3], 4096
        $region76: #{tpu_custom_call.1} parent=71 // pred_fallthru
          _
        // Predicated region
        $region77: #{tpu_custom_call.1} parent=71 // pred_check
          %p464 = pneg %p270
        $region78: #{tpu_custom_call.1} parent=71 // pred_check_branch
          %466 = sbr.rel (%p464) target = $region80
        $region79: #{tpu_custom_call.1} parent=71 // pred_region
          %467 = dma.done [#allocation6], 16
        $region80: #{tpu_custom_call.1} parent=71 // pred_fallthru
          _
        %s468 = smul.u32 2, %s34
        %p469 = scmp.lt.s32.totalorder %s468, 3
        %s470 = scalar_select %p469, %s468, 3
        %s471 = smul.addr %s470, 2
        %s472 = smul.addr %s471, 4
        %s473 = scalar_lea.vmem %s0, %s472
        %p474 = pneg %p55
        %p475 = pneg %p52
        %s476 = smul.u32 2, %s34
        %p477 = scmp.lt.s32.totalorder %s476, 3
        %s478 = scalar_select %p477, %s476, 3
        %s479 = smul.addr %s478, 4
        %s480 = scalar_lea.vmem %s1, %s479
        %p481 = pneg %p81
        %p482 = pneg %p78
        %p483 = pneg %p102
        %p484 = pneg %p99
        %p485 = pneg %p123
        %p486 = pneg %p120
        %p487 = pneg %p144
        %p488 = pneg %p141
        %p489 = pneg %p165
        %p490 = pneg %p162
        %p491 = pneg %p186
        %p492 = pneg %p183
        %p493 = pneg %p207
        %p494 = pneg %p204
        %p495 = pneg %p228
        %p496 = pneg %p225
        %p497 = pneg %p249
        %p498 = pneg %p246
        %p499 = pneg %p270
        %p500 = pneg %p267
        %p501 = pneg %p291
        %p502 = pneg %p288
        %p503 = pneg %p312
        %p504 = pneg %p309
        %p505 = pneg %p338
        %p506 = pneg %p335
        %s507 = sand.u32 %s325, 1
        %s508 = scalar_lea.sflag [#allocation4], %s507
        %s509 = sand.u32 %s325, 1
        %s510 = smul.addr %s509, 16
        %s511 = scalar_lea.vmem [#allocation7], %s510
        %p512 = pneg %p364
        %p513 = pneg %p361
        %s514 = sand.u32 %s351, 1
        %s515 = scalar_lea.sflag [#allocation9], %s514
        %s516 = sand.u32 %s351, 1
        %s517 = smul.addr %s516, 8
        %s518 = scalar_lea.vmem [#allocation8], %s517
        %s519 = smul.u32 2, %s34
        %p520 = scmp.lt.s32.totalorder %s519, 3
        %s521 = scalar_select %p520, %s519, 3
        %s522 = smul.addr %s521, 2
        %s523 = smul.addr %s522, 4
        %s524 = scalar_lea.vmem %s0, %s523
        %s525 = smul.u32 2, %s34
        %s526 = smul.u32 2, %s34
        %p527 = scmp.lt.s32.totalorder %s526, 3
        %s528 = scalar_select %p527, %s526, 3
        %s529 = smul.addr %s528, 4
        %s530 = scalar_lea.vmem %s1, %s529
        %s531 = smul.u32 2, %s34
        %s532 = smul.u32 2, %s34
        %s533 = smul.u32 2, %s34
        %v535 = vld [vmem:[%s524] sm:$0xff]
        %v536 = vld [vmem:[%s524 + $0x8] sm:$0xff]
        %v537 = vld [vmem:[#allocation2] sm:$0xff]
        %v538 = vld [vmem:[#allocation2 + $0x8] sm:$0xff]
        %v539 = vld [vmem:[#allocation2 + $0x10] sm:$0xff]
        %v540 = vld [vmem:[#allocation2 + $0x18] sm:$0xff]
        %v541 = vld [vmem:[#allocation2 + $0x20] sm:$0xff]
        %v542 = vld [vmem:[#allocation2 + $0x28] sm:$0xff]
        %v543 = vld [vmem:[#allocation2 + $0x30] sm:$0xff]
        %v544 = vld [vmem:[#allocation2 + $0x38] sm:$0xff]
        %v545 = vld [vmem:[#allocation2 + $0x40] sm:$0xff]
        %v546 = vld [vmem:[#allocation2 + $0x48] sm:$0xff]
        %v547 = vld [vmem:[#allocation2 + $0x50] sm:$0xff]
        %v548 = vld [vmem:[#allocation2 + $0x58] sm:$0xff]
        %v549 = vld [vmem:[#allocation2 + $0x60] sm:$0xff]
        %v550 = vld [vmem:[#allocation2 + $0x68] sm:$0xff]
        %v551 = vld [vmem:[#allocation2 + $0x70] sm:$0xff]
        %v552 = vld [vmem:[#allocation2 + $0x78] sm:$0xff]
        %v553 = vld [vmem:[#allocation2 + $0x80] sm:$0xff]
        %v554 = vld [vmem:[#allocation2 + $0x88] sm:$0xff]
        %v555 = vld [vmem:[#allocation2 + $0x90] sm:$0xff]
        %v556 = vld [vmem:[#allocation2 + $0x98] sm:$0xff]
        %v557 = vld [vmem:[#allocation2 + $0xa0] sm:$0xff]
        %v558 = vld [vmem:[#allocation2 + $0xa8] sm:$0xff]
        %v559 = vld [vmem:[#allocation2 + $0xb0] sm:$0xff]
        %v560 = vld [vmem:[#allocation2 + $0xb8] sm:$0xff]
        %v561 = vld [vmem:[#allocation2 + $0xc0] sm:$0xff]
        %v562 = vld [vmem:[#allocation2 + $0xc8] sm:$0xff]
        %v563 = vld [vmem:[#allocation2 + $0xd0] sm:$0xff]
        %v564 = vld [vmem:[#allocation2 + $0xd8] sm:$0xff]
        %v565 = vld [vmem:[#allocation2 + $0xe0] sm:$0xff]
        %v566 = vld [vmem:[#allocation2 + $0xe8] sm:$0xff]
        %v567 = vld [vmem:[#allocation2 + $0xf0] sm:$0xff]
        %v568 = vld [vmem:[#allocation2 + $0xf8] sm:$0xff]
        %v569 = vld [vmem:[%s530] sm:$0xf]
        %v570 = vld [vmem:[%s530 + $0x4] sm:$0xf]
        %v571 = vld [vmem:[%s3] sm:$0xff]
        %v572 = vld [vmem:[%s3 + $0x8] sm:$0xff]
        %v575 = vunpack.c.l.b16 %v569
        %v576 = vunpack.c.l.b16 %v570
        %v577 = vpack.c.b16 %v576, %v575
        %v580 = vunpack.c.l.b16 %v571
        %v581 = vunpack.c.h.b16 %v571
        %v582 = vunpack.c.l.b16 %v572
        %v583 = vunpack.c.h.b16 %v572
        %v584 = vpack.c.b16 %v582, %v580
        %v585 = vpack.c.b16 %v583, %v581
        %vm588 = vcmask 130048
        %v590 = vsel %vm588, %v577, 0
        %592 = vmatprep.subr.bf16.mxu0 %v585
        %593 = vmatpush1.bf16.msra.mxu0 %v584
        %594 = vmatprep.subr.bf16.mxu0 0
        %595 = vmatpush1.bf16.msra.mxu0 0
        %596 = vmatprep.subr.bf16.mxu0 0
        %597 = vmatpush1.bf16.msra.mxu0 0
        %598 = vmatprep.subr.bf16.mxu0 0
        %599 = vmatpush1.bf16.msra.mxu0 0
        %600 = vmatprep.subr.bf16.mxu0 0
        %601 = vmatpush1.bf16.msra.mxu0 0
        %602 = vmatprep.subr.bf16.mxu0 0
        %603 = vmatpush1.bf16.msra.mxu0 0
        %604 = vmatprep.subr.bf16.mxu0 0
        %605 = vmatpush1.bf16.msra.mxu0 0
        %606 = vmatprep.subr.bf16.mxu0 0
        %607 = vmatpush1.bf16.msra.mxu0 0
        %608 = vmatprep.subr.bf16.mxu0 0
        %609 = vmatpush1.bf16.msra.mxu0 0
        %610 = vmatprep.subr.bf16.mxu0 0
        %611 = vmatpush1.bf16.msra.mxu0 0
        %612 = vmatprep.subr.bf16.mxu0 0
        %613 = vmatpush1.bf16.msra.mxu0 0
        %614 = vmatprep.subr.bf16.mxu0 0
        %615 = vmatpush1.bf16.msra.mxu0 0
        %616 = vmatprep.subr.bf16.mxu0 0
        %617 = vmatpush1.bf16.msra.mxu0 0
        %618 = vmatprep.subr.bf16.mxu0 0
        %619 = vmatpush1.bf16.msra.mxu0 0
        %620 = vmatprep.subr.bf16.mxu0 0
        %621 = vmatpush1.bf16.msra.mxu0 0
        %622 = vmatprep.subr.bf16.mxu0 0
        %623 = vmatpush1.bf16.msra.mxu0 0
        %624 = vmatprep.mubr.bf16.mxu0 0
        %625 = vmatmul.mubr.bf16.gmra.mrb[0].mxu0 %v590
        %v626 = vpop.f32.mrb[0].mxu0
        %v627 = vadd.f32 0.0, %v626
        %v628 = vpop.f32.mrb[0].mxu0
        %v629 = vadd.f32 0.0, %v628
        %v630 = vpop.f32.mrb[0].mxu0
        %v631 = vadd.f32 0.0, %v630
        %v632 = vpop.f32.mrb[0].mxu0
        %v633 = vadd.f32 0.0, %v632
        %634 = vdwg.mxu0
        %v637 = vunpack.c.l.b16 %v535
        %v638 = vunpack.c.h.b16 %v535
        %v639 = vunpack.c.l.b16 %v536
        %v640 = vunpack.c.h.b16 %v536
        %v641 = vpack.c.b16 %v639, %v637
        %v642 = vpack.c.b16 %v640, %v638
        %v677 = vunpack.c.l.b16 %v537
        %v678 = vunpack.c.h.b16 %v537
        %v679 = vunpack.c.l.b16 %v538
        %v680 = vunpack.c.h.b16 %v538
        %v681 = vunpack.c.l.b16 %v539
        %v682 = vunpack.c.h.b16 %v539
        %v683 = vunpack.c.l.b16 %v540
        %v684 = vunpack.c.h.b16 %v540
        %v685 = vunpack.c.l.b16 %v541
        %v686 = vunpack.c.h.b16 %v541
        %v687 = vunpack.c.l.b16 %v542
        %v688 = vunpack.c.h.b16 %v542
        %v689 = vunpack.c.l.b16 %v543
        %v690 = vunpack.c.h.b16 %v543
        %v691 = vunpack.c.l.b16 %v544
        %v692 = vunpack.c.h.b16 %v544
        %v693 = vunpack.c.l.b16 %v545
        %v694 = vunpack.c.h.b16 %v545
        %v695 = vunpack.c.l.b16 %v546
        %v696 = vunpack.c.h.b16 %v546
        %v697 = vunpack.c.l.b16 %v547
        %v698 = vunpack.c.h.b16 %v547
        %v699 = vunpack.c.l.b16 %v548
        %v700 = vunpack.c.h.b16 %v548
        %v701 = vunpack.c.l.b16 %v549
        %v702 = vunpack.c.h.b16 %v549
        %v703 = vunpack.c.l.b16 %v550
        %v704 = vunpack.c.h.b16 %v550
        %v705 = vunpack.c.l.b16 %v551
        %v706 = vunpack.c.h.b16 %v551
        %v707 = vunpack.c.l.b16 %v552
        %v708 = vunpack.c.h.b16 %v552
        %v709 = vunpack.c.l.b16 %v553
        %v710 = vunpack.c.h.b16 %v553
        %v711 = vunpack.c.l.b16 %v554
        %v712 = vunpack.c.h.b16 %v554
        %v713 = vunpack.c.l.b16 %v555
        %v714 = vunpack.c.h.b16 %v555
        %v715 = vunpack.c.l.b16 %v556
        %v716 = vunpack.c.h.b16 %v556
        %v717 = vunpack.c.l.b16 %v557
        %v718 = vunpack.c.h.b16 %v557
        %v719 = vunpack.c.l.b16 %v558
        %v720 = vunpack.c.h.b16 %v558
        %v721 = vunpack.c.l.b16 %v559
        %v722 = vunpack.c.h.b16 %v559
        %v723 = vunpack.c.l.b16 %v560
        %v724 = vunpack.c.h.b16 %v560
        %v725 = vunpack.c.l.b16 %v561
        %v726 = vunpack.c.h.b16 %v561
        %v727 = vunpack.c.l.b16 %v562
        %v728 = vunpack.c.h.b16 %v562
        %v729 = vunpack.c.l.b16 %v563
        %v730 = vunpack.c.h.b16 %v563
        %v731 = vunpack.c.l.b16 %v564
        %v732 = vunpack.c.h.b16 %v564
        %v733 = vunpack.c.l.b16 %v565
        %v734 = vunpack.c.h.b16 %v565
        %v735 = vunpack.c.l.b16 %v566
        %v736 = vunpack.c.h.b16 %v566
        %v737 = vunpack.c.l.b16 %v567
        %v738 = vunpack.c.h.b16 %v567
        %v739 = vunpack.c.l.b16 %v568
        %v740 = vunpack.c.h.b16 %v568
        %v741 = vpack.c.b16 %v679, %v677
        %v742 = vpack.c.b16 %v680, %v678
        %v743 = vpack.c.b16 %v683, %v681
        %v744 = vpack.c.b16 %v684, %v682
        %v745 = vpack.c.b16 %v687, %v685
        %v746 = vpack.c.b16 %v688, %v686
        %v747 = vpack.c.b16 %v691, %v689
        %v748 = vpack.c.b16 %v692, %v690
        %v749 = vpack.c.b16 %v695, %v693
        %v750 = vpack.c.b16 %v696, %v694
        %v751 = vpack.c.b16 %v699, %v697
        %v752 = vpack.c.b16 %v700, %v698
        %v753 = vpack.c.b16 %v703, %v701
        %v754 = vpack.c.b16 %v704, %v702
        %v755 = vpack.c.b16 %v707, %v705
        %v756 = vpack.c.b16 %v708, %v706
        %v757 = vpack.c.b16 %v711, %v709
        %v758 = vpack.c.b16 %v712, %v710
        %v759 = vpack.c.b16 %v715, %v713
        %v760 = vpack.c.b16 %v716, %v714
        %v761 = vpack.c.b16 %v719, %v717
        %v762 = vpack.c.b16 %v720, %v718
        %v763 = vpack.c.b16 %v723, %v721
        %v764 = vpack.c.b16 %v724, %v722
        %v765 = vpack.c.b16 %v727, %v725
        %v766 = vpack.c.b16 %v728, %v726
        %v767 = vpack.c.b16 %v731, %v729
        %v768 = vpack.c.b16 %v732, %v730
        %v769 = vpack.c.b16 %v735, %v733
        %v770 = vpack.c.b16 %v736, %v734
        %v771 = vpack.c.b16 %v739, %v737
        %v772 = vpack.c.b16 %v740, %v738
        %805 = vmatprep.subr.bf16.mxu0 %v742
        %806 = vmatpush1.bf16.msra.mxu0 %v741
        %807 = vmatprep.subr.bf16.mxu0 %v744
        %808 = vmatpush1.bf16.msra.mxu0 %v743
        %809 = vmatprep.subr.bf16.mxu0 %v746
        %810 = vmatpush1.bf16.msra.mxu0 %v745
        %811 = vmatprep.subr.bf16.mxu0 %v748
        %812 = vmatpush1.bf16.msra.mxu0 %v747
        %813 = vmatprep.subr.bf16.mxu0 %v750
        %814 = vmatpush1.bf16.msra.mxu0 %v749
        %815 = vmatprep.subr.bf16.mxu0 %v752
        %816 = vmatpush1.bf16.msra.mxu0 %v751
        %817 = vmatprep.subr.bf16.mxu0 %v754
        %818 = vmatpush1.bf16.msra.mxu0 %v753
        %819 = vmatprep.subr.bf16.mxu0 %v756
        %820 = vmatpush1.bf16.msra.mxu0 %v755
        %821 = vmatprep.subr.bf16.mxu0 %v758
        %822 = vmatpush1.bf16.msra.mxu0 %v757
        %823 = vmatprep.subr.bf16.mxu0 %v760
        %824 = vmatpush1.bf16.msra.mxu0 %v759
        %825 = vmatprep.subr.bf16.mxu0 %v762
        %826 = vmatpush1.bf16.msra.mxu0 %v761
        %827 = vmatprep.subr.bf16.mxu0 %v764
        %828 = vmatpush1.bf16.msra.mxu0 %v763
        %829 = vmatprep.subr.bf16.mxu0 %v766
        %830 = vmatpush1.bf16.msra.mxu0 %v765
        %831 = vmatprep.subr.bf16.mxu0 %v768
        %832 = vmatpush1.bf16.msra.mxu0 %v767
        %833 = vmatprep.subr.bf16.mxu0 %v770
        %834 = vmatpush1.bf16.msra.mxu0 %v769
        %835 = vmatprep.subr.bf16.mxu0 %v772
        %836 = vmatpush1.bf16.msra.mxu0 %v771
        %837 = vmatprep.mubr.bf16.mxu0 %v642
        %838 = vmatmul.mubr.bf16.gmra.mrb[0].mxu0 %v641
        %v839 = vpop.f32.mrb[0].mxu0
        %v840 = vadd.f32 %v627, %v839
        %v841 = vpop.f32.mrb[0].mxu0
        %v842 = vadd.f32 %v629, %v841
        %v843 = vpop.f32.mrb[0].mxu0
        %v844 = vadd.f32 %v631, %v843
        %v845 = vpop.f32.mrb[0].mxu0
        %v846 = vadd.f32 %v633, %v845
        %847 = vdwg.mxu0
        %v848 = vld [vmem:[%s4] sm:$0x3]
        %v850 = vlaneseq
        %v851 = vshrl.u32 %v850, 7
        %v852 = vsub.s32 0, %v851
        %v853 = vrot.slane %v848, %v852
        %v854 = vlaneseq
        %v855 = vshrl.u32 %v854, 7
        %v856 = vsub.s32 1, %v855
        %v857 = vrot.slane %v848, %v856
        %v860 = vadd.f32 %v840, %v853
        %v861 = vadd.f32 %v842, %v857
        %v862 = vadd.f32 %v844, %v853
        %v863 = vadd.f32 %v846, %v857
        %v864 = vmax.f32 %v860, 0.0
        %v865 = vmax.f32 %v861, 0.0
        %v866 = vmax.f32 %v862, 0.0
        %v867 = vmax.f32 %v863, 0.0
        %v868 = vpack.c.bf16 %v866, %v864
        %v869 = vpack.c.bf16 %v867, %v865
        %v870 = vld [vmem:[%s5] sm:$0xf]
        %v871 = vld [vmem:[%s5 + $0x4] sm:$0xf]
        %v872 = vld [vmem:[%s5 + $0x8] sm:$0xf]
        %v873 = vld [vmem:[%s5 + $0xc] sm:$0xf]
        %v874 = vld [vmem:[%s5 + $0x10] sm:$0xf]
        %v875 = vld [vmem:[%s5 + $0x14] sm:$0xf]
        %v876 = vld [vmem:[%s5 + $0x18] sm:$0xf]
        %v877 = vld [vmem:[%s5 + $0x1c] sm:$0xf]
        %v878 = vld [vmem:[%s5 + $0x20] sm:$0xf]
        %v879 = vld [vmem:[%s5 + $0x24] sm:$0xf]
        %v880 = vld [vmem:[%s5 + $0x28] sm:$0xf]
        %v881 = vld [vmem:[%s5 + $0x2c] sm:$0xf]
        %v882 = vld [vmem:[%s5 + $0x30] sm:$0xf]
        %v883 = vld [vmem:[%s5 + $0x34] sm:$0xf]
        %v884 = vld [vmem:[%s5 + $0x38] sm:$0xf]
        %v885 = vld [vmem:[%s5 + $0x3c] sm:$0xf]
        %v886 = vld [vmem:[%s5 + $0x40] sm:$0xf]
        %v887 = vld [vmem:[%s5 + $0x44] sm:$0xf]
        %v888 = vld [vmem:[%s5 + $0x48] sm:$0xf]
        %v889 = vld [vmem:[%s5 + $0x4c] sm:$0xf]
        %v890 = vld [vmem:[%s5 + $0x50] sm:$0xf]
        %v891 = vld [vmem:[%s5 + $0x54] sm:$0xf]
        %v892 = vld [vmem:[%s5 + $0x58] sm:$0xf]
        %v893 = vld [vmem:[%s5 + $0x5c] sm:$0xf]
        %v894 = vld [vmem:[%s5 + $0x60] sm:$0xf]
        %v895 = vld [vmem:[%s5 + $0x64] sm:$0xf]
        %v896 = vld [vmem:[%s5 + $0x68] sm:$0xf]
        %v897 = vld [vmem:[%s5 + $0x6c] sm:$0xf]
        %v898 = vld [vmem:[%s5 + $0x70] sm:$0xf]
        %v899 = vld [vmem:[%s5 + $0x74] sm:$0xf]
        %v900 = vld [vmem:[%s5 + $0x78] sm:$0xf]
        %v901 = vld [vmem:[%s5 + $0x7c] sm:$0xf]
        %v902 = vld [vmem:[%s6] sm:$0x1]
        %v904 = vlaneseq
        %v905 = vshrl.u32 %v904, 7
        %v906 = vsub.s32 0, %v905
        %v907 = vrot.slane %v902, %v906
        %v941 = vunpack.c.l.b16 %v870
        %v942 = vunpack.c.l.b16 %v871
        %v943 = vunpack.c.l.b16 %v872
        %v944 = vunpack.c.l.b16 %v873
        %v945 = vunpack.c.l.b16 %v874
        %v946 = vunpack.c.l.b16 %v875
        %v947 = vunpack.c.l.b16 %v876
        %v948 = vunpack.c.l.b16 %v877
        %v949 = vunpack.c.l.b16 %v878
        %v950 = vunpack.c.l.b16 %v879
        %v951 = vunpack.c.l.b16 %v880
        %v952 = vunpack.c.l.b16 %v881
        %v953 = vunpack.c.l.b16 %v882
        %v954 = vunpack.c.l.b16 %v883
        %v955 = vunpack.c.l.b16 %v884
        %v956 = vunpack.c.l.b16 %v885
        %v957 = vunpack.c.l.b16 %v886
        %v958 = vunpack.c.l.b16 %v887
        %v959 = vunpack.c.l.b16 %v888
        %v960 = vunpack.c.l.b16 %v889
        %v961 = vunpack.c.l.b16 %v890
        %v962 = vunpack.c.l.b16 %v891
        %v963 = vunpack.c.l.b16 %v892
        %v964 = vunpack.c.l.b16 %v893
        %v965 = vunpack.c.l.b16 %v894
        %v966 = vunpack.c.l.b16 %v895
        %v967 = vunpack.c.l.b16 %v896
        %v968 = vunpack.c.l.b16 %v897
        %v969 = vunpack.c.l.b16 %v898
        %v970 = vunpack.c.l.b16 %v899
        %v971 = vunpack.c.l.b16 %v900
        %v972 = vunpack.c.l.b16 %v901
        %v973 = vpack.c.b16 %v942, %v941
        %v974 = vpack.c.b16 %v944, %v943
        %v975 = vpack.c.b16 %v946, %v945
        %v976 = vpack.c.b16 %v948, %v947
        %v977 = vpack.c.b16 %v950, %v949
        %v978 = vpack.c.b16 %v952, %v951
        %v979 = vpack.c.b16 %v954, %v953
        %v980 = vpack.c.b16 %v956, %v955
        %v981 = vpack.c.b16 %v958, %v957
        %v982 = vpack.c.b16 %v960, %v959
        %v983 = vpack.c.b16 %v962, %v961
        %v984 = vpack.c.b16 %v964, %v963
        %v985 = vpack.c.b16 %v966, %v965
        %v986 = vpack.c.b16 %v968, %v967
        %v987 = vpack.c.b16 %v970, %v969
        %v988 = vpack.c.b16 %v972, %v971
        %1005 = vmatprep.subr.bf16.mxu0 0
        %1006 = vmatpush1.bf16.msra.mxu0 %v973
        %1007 = vmatprep.subr.bf16.mxu0 0
        %1008 = vmatpush1.bf16.msra.mxu0 %v974
        %1009 = vmatprep.subr.bf16.mxu0 0
        %1010 = vmatpush1.bf16.msra.mxu0 %v975
        %1011 = vmatprep.subr.bf16.mxu0 0
        %1012 = vmatpush1.bf16.msra.mxu0 %v976
        %1013 = vmatprep.subr.bf16.mxu0 0
        %1014 = vmatpush1.bf16.msra.mxu0 %v977
        %1015 = vmatprep.subr.bf16.mxu0 0
        %1016 = vmatpush1.bf16.msra.mxu0 %v978
        %1017 = vmatprep.subr.bf16.mxu0 0
        %1018 = vmatpush1.bf16.msra.mxu0 %v979
        %1019 = vmatprep.subr.bf16.mxu0 0
        %1020 = vmatpush1.bf16.msra.mxu0 %v980
        %1021 = vmatprep.subr.bf16.mxu0 0
        %1022 = vmatpush1.bf16.msra.mxu0 %v981
        %1023 = vmatprep.subr.bf16.mxu0 0
        %1024 = vmatpush1.bf16.msra.mxu0 %v982
        %1025 = vmatprep.subr.bf16.mxu0 0
        %1026 = vmatpush1.bf16.msra.mxu0 %v983
        %1027 = vmatprep.subr.bf16.mxu0 0
        %1028 = vmatpush1.bf16.msra.mxu0 %v984
        %1029 = vmatprep.subr.bf16.mxu0 0
        %1030 = vmatpush1.bf16.msra.mxu0 %v985
        %1031 = vmatprep.subr.bf16.mxu0 0
        %1032 = vmatpush1.bf16.msra.mxu0 %v986
        %1033 = vmatprep.subr.bf16.mxu0 0
        %1034 = vmatpush1.bf16.msra.mxu0 %v987
        %1035 = vmatprep.subr.bf16.mxu0 0
        %1036 = vmatpush1.bf16.msra.mxu0 %v988
        %1037 = vmatprep.mubr.bf16.mxu0 %v869
        %1038 = vmatmul.mubr.bf16.gmra.mrb[0].mxu0 %v868
        %v1039 = vpop.f32.mrb[0].mxu0
        %v1040 = vadd.f32 %v907, %v1039
        %v1041 = vpop.f32.mrb[0].mxu0
        %v1042 = vpop.f32.mrb[0].mxu0
        %v1043 = vadd.f32 %v907, %v1042
        %v1044 = vpop.f32.mrb[0].mxu0
        %1045 = vdwg.mxu0
        %v1046 = vld [vmem:[%s7] sm:$0x7]
        %v1047 = vlaneseq
        %v1048 = vand.u32 %v1047, 127
        %vm1049 = vcmp.ge.s32.totalorder %v1048, 32
        %vm1050 = vcmp.lt.s32.totalorder %v1048, 64
        %vm1051 = vmand %vm1049, %vm1050
        %1053 = vset.pattern.permute.xlu0 0
        %1054 = vperm.xlu0 %1053, %v1040
        %v1055 = vpop.permute.xlu0 %1054
        %1058 = vset.pattern.permute.xlu0 0
        %1059 = vperm.xlu0 %1058, %v1043
        %v1060 = vpop.permute.xlu0 %1059
        %v1062 = vlaneseq
        %v1063 = vshrl.u32 %v1062, 7
        %v1064 = vsub.s32 0, %v1063
        %v1065 = vrot.slane %v1046, %v1064
        %v1066 = vsub.f32 %v1055, %v1065
        %v1067 = vsub.f32 %v1060, %v1065
        %v1068 = vmul.f32 %v1066, %v1066
        %v1069 = vmul.f32 %v1067, %v1067
        %v1070 = vadd.f32 %v1068, 0.0
        %v1071 = vadd.f32 %v1069, 0.0
        %1072 = vset.pattern.permute.xlu0 1
        %1073 = vperm.xlu0 %1072, %v1040
        %v1074 = vpop.permute.xlu0 %1073
        %1076 = vset.pattern.permute.xlu0 1
        %1077 = vperm.xlu0 %1076, %v1043
        %v1078 = vpop.permute.xlu0 %1077
        %v1080 = vlaneseq
        %v1081 = vshrl.u32 %v1080, 7
        %v1082 = vsub.s32 1, %v1081
        %v1083 = vrot.slane %v1046, %v1082
        %v1084 = vsub.f32 %v1074, %v1083
        %v1085 = vsub.f32 %v1078, %v1083
        %v1086 = vmul.f32 %v1084, %v1084
        %v1087 = vmul.f32 %v1085, %v1085
        %v1088 = vadd.f32 %v1070, %v1086
        %v1089 = vadd.f32 %v1071, %v1087
        %1090 = vset.pattern.permute.xlu0 2
        %1091 = vperm.xlu0 %1090, %v1040
        %v1092 = vpop.permute.xlu0 %1091
        %1094 = vset.pattern.permute.xlu0 2
        %1095 = vperm.xlu0 %1094, %v1043
        %v1096 = vpop.permute.xlu0 %1095
        %v1098 = vlaneseq
        %v1099 = vshrl.u32 %v1098, 7
        %v1100 = vsub.s32 2, %v1099
        %v1101 = vrot.slane %v1046, %v1100
        %v1102 = vsub.f32 %v1092, %v1101
        %v1103 = vsub.f32 %v1096, %v1101
        %v1104 = vmul.f32 %v1102, %v1102
        %v1105 = vmul.f32 %v1103, %v1103
        %v1106 = vadd.f32 %v1088, %v1104
        %v1107 = vadd.f32 %v1089, %v1105
        %v1108 = vsub.f32 0.0, %v1106
        %v1109 = vsub.f32 0.0, %v1107
        %v1110 = vsel %vm1051, 1, 0
        %vm1111 = vcmp.eq.s32.totalorder %v1110, 1
        %v1112 = vsel %vm1111, %v1108, -1e+30
        %v1113 = vsel %vm1111, %v1109, -1e+30
        %1114 = vmax.xlane.f32.xlu0 %v1112
        %v1115 = vpop.xlane.xlu0 %1114
        %1116 = vmax.xlane.f32.xlu0 %v1113
        %v1117 = vpop.xlane.xlu0 %1116
        %v1118 = vsub.f32 %v1108, %v1115
        %v1119 = vsub.f32 %v1109, %v1117
        %v1120 = vmul.f32 %v1118, 1.442695
        %v1121 = vpow.pop %v1120
        %v1122 = vmul.f32 %v1119, 1.442695
        %v1123 = vpow.pop %v1122
        %v1124 = vsel %vm1111, %v1121, 0.0
        %v1125 = vsel %vm1111, %v1123, 0.0
        %1126 = vadd.xlane.f32.xlu0 %v1124
        %v1127 = vpop.xlane.xlu0 %1126
        %1128 = vadd.xlane.f32.xlu0 %v1125
        %v1129 = vpop.xlane.xlu0 %1128
        %v1130 = vrcp.pop %v1127
        %v1131 = vmul.f32 %v1124, %v1130
        %v1132 = vrcp.pop %v1129
        %v1133 = vmul.f32 %v1125, %v1132
        %v1134 = vsub.f32 0.0, %v1115
        %v1135 = vsub.f32 0.0, %v1117
        %v1136 = vsub.s32 %v1048, 32
        %vm1137 = vcmp.le.f32.partialorder %v1106, %v1134
        %vm1138 = vcmp.le.f32.partialorder %v1107, %v1135
        %vm1139 = vmand %vm1111, %vm1137
        %vm1140 = vmand %vm1111, %vm1138
        %v1141 = vsel %vm1139, %v1136, 32
        %v1142 = vsel %vm1140, %v1136, 32
        %v1143 = vand.u32 %v1141, 65535
        %v1144 = vshra.s32 %v1141, 16
        %v1145 = vcvt.s32.f32 %v1143
        %v1146 = vcvt.s32.f32 %v1144
        %1147 = vmin.xlane.f32.xlu0 %v1146
        %v1148 = vpop.xlane.xlu0 %1147
        %vm1149 = vcmp.eq.f32.partialorder %v1146, %v1148
        %v1150 = vsel %vm1149, %v1145, inf
        %1151 = vmin.xlane.f32.xlu0 %v1150
        %v1152 = vpop.xlane.xlu0 %1151
        %v1153 = vcvt.f32.s32 %v1152
        %v1154 = vcvt.f32.s32 %v1148
        %v1155 = vshll.u32 %v1154, 16
        %v1156 = vadd.s32 %v1155, %v1153
        %v1157 = vand.u32 %v1142, 65535
        %v1158 = vshra.s32 %v1142, 16
        %v1159 = vcvt.s32.f32 %v1157
        %v1160 = vcvt.s32.f32 %v1158
        %1161 = vmin.xlane.f32.xlu0 %v1160
        %v1162 = vpop.xlane.xlu0 %1161
        %vm1163 = vcmp.eq.f32.partialorder %v1160, %v1162
        %v1164 = vsel %vm1163, %v1159, inf
        %1165 = vmin.xlane.f32.xlu0 %v1164
        %v1166 = vpop.xlane.xlu0 %1165
        %v1167 = vcvt.f32.s32 %v1166
        %v1168 = vcvt.f32.s32 %v1162
        %v1169 = vshll.u32 %v1168, 16
        %v1170 = vadd.s32 %v1169, %v1167
        %vm1171 = vcmp.eq.s32.totalorder %v1136, %v1156
        %vm1172 = vcmp.eq.s32.totalorder %v1136, %v1170
        %vm1173 = vmand %vm1111, %vm1171
        %vm1174 = vmand %vm1111, %vm1172
        %v1175 = vsel %vm1173, 1, 0
        %v1176 = vsel %vm1174, 1, 0
        %v1177 = vcvt.s32.f32 %v1175
        %v1178 = vcvt.s32.f32 %v1176
        %v1179 = vmul.f32 %v1177, %v1065
        %v1180 = vmul.f32 %v1178, %v1065
        %1181 = vadd.xlane.f32.xlu0 %v1179
        %v1182 = vpop.xlane.xlu0 %1181
        %1183 = vadd.xlane.f32.xlu0 %v1180
        %v1184 = vpop.xlane.xlu0 %1183
        %v1185 = vmul.f32 %v1177, %v1083
        %v1186 = vmul.f32 %v1178, %v1083
        %1187 = vadd.xlane.f32.xlu0 %v1185
        %v1188 = vpop.xlane.xlu0 %1187
        %1189 = vadd.xlane.f32.xlu0 %v1186
        %v1190 = vpop.xlane.xlu0 %1189
        %v1191 = vmul.f32 %v1177, %v1101
        %v1192 = vmul.f32 %v1178, %v1101
        %1193 = vadd.xlane.f32.xlu0 %v1191
        %v1194 = vpop.xlane.xlu0 %1193
        %1195 = vadd.xlane.f32.xlu0 %v1192
        %v1196 = vpop.xlane.xlu0 %1195
        %v1197 = vld [vmem:[%s9] sm:$0xf]
        %v1198 = vld [vmem:[%s9 + $0x4] sm:$0xf]
        %v1199 = vld [vmem:[#allocation5] sm:$0x1]
        %v1201 = vlaneseq
        %v1202 = vshrl.u32 %v1201, 7
        %v1203 = vsub.s32 0, %v1202
        %v1204 = vrot.slane %v1199, %v1203
        %v1208 = vunpack.c.l.b16 %v1197
        %v1209 = vunpack.c.l.b16 %v1198
        %v1210 = vpack.c.b16 %v1209, %v1208
        %1212 = vmatprep.subr.bf16.mxu0 0
        %1213 = vmatpush1.bf16.msra.mxu0 %v1210
        %1214 = vmatprep.subr.bf16.mxu0 0
        %1215 = vmatpush1.bf16.msra.mxu0 0
        %1216 = vmatprep.subr.bf16.mxu0 0
        %1217 = vmatpush1.bf16.msra.mxu0 0
        %1218 = vmatprep.subr.bf16.mxu0 0
        %1219 = vmatpush1.bf16.msra.mxu0 0
        %1220 = vmatprep.subr.bf16.mxu0 0
        %1221 = vmatpush1.bf16.msra.mxu0 0
        %1222 = vmatprep.subr.bf16.mxu0 0
        %1223 = vmatpush1.bf16.msra.mxu0 0
        %1224 = vmatprep.subr.bf16.mxu0 0
        %1225 = vmatpush1.bf16.msra.mxu0 0
        %1226 = vmatprep.subr.bf16.mxu0 0
        %1227 = vmatpush1.bf16.msra.mxu0 0
        %1228 = vmatprep.subr.bf16.mxu0 0
        %1229 = vmatpush1.bf16.msra.mxu0 0
        %1230 = vmatprep.subr.bf16.mxu0 0
        %1231 = vmatpush1.bf16.msra.mxu0 0
        %1232 = vmatprep.subr.bf16.mxu0 0
        %1233 = vmatpush1.bf16.msra.mxu0 0
        %1234 = vmatprep.subr.bf16.mxu0 0
        %1235 = vmatpush1.bf16.msra.mxu0 0
        %1236 = vmatprep.subr.bf16.mxu0 0
        %1237 = vmatpush1.bf16.msra.mxu0 0
        %1238 = vmatprep.subr.bf16.mxu0 0
        %1239 = vmatpush1.bf16.msra.mxu0 0
        %1240 = vmatprep.subr.bf16.mxu0 0
        %1241 = vmatpush1.bf16.msra.mxu0 0
        %1242 = vmatprep.subr.bf16.mxu0 0
        %1243 = vmatpush1.bf16.msra.mxu0 0
        %1244 = vmatprep.mubr.bf16.mxu0 0
        %1245 = vmatmul.mubr.bf16.gmra.mrb[0].mxu0 %v590
        %v1246 = vpop.f32.mrb[0].mxu0
        %v1247 = vadd.f32 %v1204, %v1246
        %v1248 = vpop.f32.mrb[0].mxu0
        %v1249 = vpop.f32.mrb[0].mxu0
        %v1250 = vadd.f32 %v1204, %v1249
        %v1251 = vpop.f32.mrb[0].mxu0
        %1252 = vdwg.mxu0
        %v1253 = vld [vmem:[%s8] sm:$0x1]
        %v1254 = vlaneseq
        %v1255 = vshrl.u32 %v1254, 7
        %v1256 = vsub.s32 0, %v1255
        %v1257 = vrot.slane %v1253, %v1256
        %v1258 = vmul.f32 %v1182, %v1257
        %v1259 = vmul.f32 %v1184, %v1257
        %v1260 = vadd.f32 %v1247, %v1258
        %v1261 = vadd.f32 %v1250, %v1259
        %v1262 = vld [vmem:[%s8 + $0x1] sm:$0x1]
        %v1263 = vlaneseq
        %v1264 = vshrl.u32 %v1263, 7
        %v1265 = vsub.s32 0, %v1264
        %v1266 = vrot.slane %v1262, %v1265
        %v1267 = vmul.f32 %v1188, %v1266
        %v1268 = vmul.f32 %v1190, %v1266
        %v1269 = vadd.f32 %v1260, %v1267
        %v1270 = vadd.f32 %v1261, %v1268
        %v1271 = vld [vmem:[%s8 + $0x2] sm:$0x1]
        %v1272 = vlaneseq
        %v1273 = vshrl.u32 %v1272, 7
        %v1274 = vsub.s32 0, %v1273
        %v1275 = vrot.slane %v1271, %v1274
        %v1276 = vmul.f32 %v1194, %v1275
        %v1277 = vmul.f32 %v1196, %v1275
        %v1278 = vadd.f32 %v1269, %v1276
        %v1279 = vadd.f32 %v1270, %v1277
        %v1280 = vmax.f32 %v1278, 0.0
        %v1281 = vmax.f32 %v1279, 0.0
        %v1282 = vpack.c.bf16 %v1281, %v1280
        %v1283 = vld [vmem:[%s11] sm:$0xff]
        %v1284 = vld [vmem:[%s11 + $0x8] sm:$0xff]
        %v1285 = vld [vmem:[%s11 + $0x10] sm:$0xff]
        %v1286 = vld [vmem:[%s11 + $0x18] sm:$0xff]
        %v1287 = vld [vmem:[%s11 + $0x20] sm:$0xff]
        %v1288 = vld [vmem:[%s11 + $0x28] sm:$0xff]
        %v1289 = vld [vmem:[%s11 + $0x30] sm:$0xff]
        %v1290 = vld [vmem:[%s11 + $0x38] sm:$0xff]
        %v1291 = vld [vmem:[%s11 + $0x40] sm:$0xff]
        %v1292 = vld [vmem:[%s11 + $0x48] sm:$0xff]
        %v1293 = vld [vmem:[%s11 + $0x50] sm:$0xff]
        %v1294 = vld [vmem:[%s11 + $0x58] sm:$0xff]
        %v1295 = vld [vmem:[%s11 + $0x60] sm:$0xff]
        %v1296 = vld [vmem:[%s11 + $0x68] sm:$0xff]
        %v1297 = vld [vmem:[%s11 + $0x70] sm:$0xff]
        %v1298 = vld [vmem:[%s11 + $0x78] sm:$0xff]
        %v1299 = vld [vmem:[%s12] sm:$0x3]
        %v1301 = vlaneseq
        %v1302 = vshrl.u32 %v1301, 7
        %v1303 = vsub.s32 0, %v1302
        %v1304 = vrot.slane %v1299, %v1303
        %v1305 = vlaneseq
        %v1306 = vshrl.u32 %v1305, 7
        %v1307 = vsub.s32 1, %v1306
        %v1308 = vrot.slane %v1299, %v1307
        %v1327 = vunpack.c.l.b16 %v1283
        %v1328 = vunpack.c.h.b16 %v1283
        %v1329 = vunpack.c.l.b16 %v1284
        %v1330 = vunpack.c.h.b16 %v1284
        %v1331 = vunpack.c.l.b16 %v1285
        %v1332 = vunpack.c.h.b16 %v1285
        %v1333 = vunpack.c.l.b16 %v1286
        %v1334 = vunpack.c.h.b16 %v1286
        %v1335 = vunpack.c.l.b16 %v1287
        %v1336 = vunpack.c.h.b16 %v1287
        %v1337 = vunpack.c.l.b16 %v1288
        %v1338 = vunpack.c.h.b16 %v1288
        %v1339 = vunpack.c.l.b16 %v1289
        %v1340 = vunpack.c.h.b16 %v1289
        %v1341 = vunpack.c.l.b16 %v1290
        %v1342 = vunpack.c.h.b16 %v1290
        %v1343 = vunpack.c.l.b16 %v1291
        %v1344 = vunpack.c.h.b16 %v1291
        %v1345 = vunpack.c.l.b16 %v1292
        %v1346 = vunpack.c.h.b16 %v1292
        %v1347 = vunpack.c.l.b16 %v1293
        %v1348 = vunpack.c.h.b16 %v1293
        %v1349 = vunpack.c.l.b16 %v1294
        %v1350 = vunpack.c.h.b16 %v1294
        %v1351 = vunpack.c.l.b16 %v1295
        %v1352 = vunpack.c.h.b16 %v1295
        %v1353 = vunpack.c.l.b16 %v1296
        %v1354 = vunpack.c.h.b16 %v1296
        %v1355 = vunpack.c.l.b16 %v1297
        %v1356 = vunpack.c.h.b16 %v1297
        %v1357 = vunpack.c.l.b16 %v1298
        %v1358 = vunpack.c.h.b16 %v1298
        %v1359 = vpack.c.b16 %v1329, %v1327
        %v1360 = vpack.c.b16 %v1330, %v1328
        %v1361 = vpack.c.b16 %v1333, %v1331
        %v1362 = vpack.c.b16 %v1334, %v1332
        %v1363 = vpack.c.b16 %v1337, %v1335
        %v1364 = vpack.c.b16 %v1338, %v1336
        %v1365 = vpack.c.b16 %v1341, %v1339
        %v1366 = vpack.c.b16 %v1342, %v1340
        %v1367 = vpack.c.b16 %v1345, %v1343
        %v1368 = vpack.c.b16 %v1346, %v1344
        %v1369 = vpack.c.b16 %v1349, %v1347
        %v1370 = vpack.c.b16 %v1350, %v1348
        %v1371 = vpack.c.b16 %v1353, %v1351
        %v1372 = vpack.c.b16 %v1354, %v1352
        %v1373 = vpack.c.b16 %v1357, %v1355
        %v1374 = vpack.c.b16 %v1358, %v1356
        %1391 = vmatprep.subr.bf16.mxu0 %v1360
        %1392 = vmatpush1.bf16.msra.mxu0 %v1359
        %1393 = vmatprep.subr.bf16.mxu0 %v1362
        %1394 = vmatpush1.bf16.msra.mxu0 %v1361
        %1395 = vmatprep.subr.bf16.mxu0 %v1364
        %1396 = vmatpush1.bf16.msra.mxu0 %v1363
        %1397 = vmatprep.subr.bf16.mxu0 %v1366
        %1398 = vmatpush1.bf16.msra.mxu0 %v1365
        %1399 = vmatprep.subr.bf16.mxu0 %v1368
        %1400 = vmatpush1.bf16.msra.mxu0 %v1367
        %1401 = vmatprep.subr.bf16.mxu0 %v1370
        %1402 = vmatpush1.bf16.msra.mxu0 %v1369
        %1403 = vmatprep.subr.bf16.mxu0 %v1372
        %1404 = vmatpush1.bf16.msra.mxu0 %v1371
        %1405 = vmatprep.subr.bf16.mxu0 %v1374
        %1406 = vmatpush1.bf16.msra.mxu0 %v1373
        %1407 = vmatprep.subr.bf16.mxu0 0
        %1408 = vmatpush1.bf16.msra.mxu0 0
        %1409 = vmatprep.subr.bf16.mxu0 0
        %1410 = vmatpush1.bf16.msra.mxu0 0
        %1411 = vmatprep.subr.bf16.mxu0 0
        %1412 = vmatpush1.bf16.msra.mxu0 0
        %1413 = vmatprep.subr.bf16.mxu0 0
        %1414 = vmatpush1.bf16.msra.mxu0 0
        %1415 = vmatprep.subr.bf16.mxu0 0
        %1416 = vmatpush1.bf16.msra.mxu0 0
        %1417 = vmatprep.subr.bf16.mxu0 0
        %1418 = vmatpush1.bf16.msra.mxu0 0
        %1419 = vmatprep.subr.bf16.mxu0 0
        %1420 = vmatpush1.bf16.msra.mxu0 0
        %1421 = vmatprep.subr.bf16.mxu0 0
        %1422 = vmatpush1.bf16.msra.mxu0 0
        %1423 = vmatprep.mubr.bf16.mxu0 0
        %1424 = vmatmul.mubr.bf16.gmra.mrb[0].mxu0 %v1282
        %v1425 = vpop.f32.mrb[0].mxu0
        %v1426 = vadd.f32 %v1304, %v1425
        %v1427 = vpop.f32.mrb[0].mxu0
        %v1428 = vadd.f32 %v1308, %v1427
        %v1429 = vpop.f32.mrb[0].mxu0
        %v1430 = vadd.f32 %v1304, %v1429
        %v1431 = vpop.f32.mrb[0].mxu0
        %v1432 = vadd.f32 %v1308, %v1431
        %1433 = vdwg.mxu0
        %v1434 = vxor.u32 %v1426, 2147483648
        %v1435 = vxor.u32 %v1428, 2147483648
        %v1436 = vxor.u32 %v1430, 2147483648
        %v1437 = vxor.u32 %v1432, 2147483648
        %v1438 = vmul.f32 %v1434, 1.442695
        %v1439 = vpow.pop %v1438
        %v1440 = vmul.f32 %v1435, 1.442695
        %v1441 = vpow.pop %v1440
        %v1442 = vmul.f32 %v1436, 1.442695
        %v1443 = vpow.pop %v1442
        %v1444 = vmul.f32 %v1437, 1.442695
        %v1445 = vpow.pop %v1444
        %v1446 = vadd.f32 %v1439, 1.0
        %v1447 = vadd.f32 %v1441, 1.0
        %v1448 = vadd.f32 %v1443, 1.0
        %v1449 = vadd.f32 %v1445, 1.0
        %v1450 = vrcp.pop %v1446
        %v1451 = vmul.f32 1.0, %v1450
        %v1452 = vrcp.pop %v1447
        %v1453 = vmul.f32 1.0, %v1452
        %v1454 = vrcp.pop %v1448
        %v1455 = vmul.f32 1.0, %v1454
        %v1456 = vrcp.pop %v1449
        %v1457 = vmul.f32 1.0, %v1456
        %v1458 = vpack.c.bf16 %v1455, %v1451
        %v1459 = vpack.c.bf16 %v1457, %v1453
        %v1462 = vunpack.c.l.b16 %v1458
        %v1463 = vunpack.c.l.b16 %v1459
        %v1464 = vunpack.c.h.b16 %v1458
        %v1465 = vunpack.c.h.b16 %v1459
        %v1466 = vpack.c.b16 %v1463, %v1462
        %v1467 = vpack.c.b16 %v1465, %v1464
        %1470 = vst [vmem:[%s511] sm:$0xff] %v1466
        %1471 = vst [vmem:[%s511 + $0x8] sm:$0xff] %v1467
        %vm1472 = vcmp.eq.s32.totalorder %v1048, 0
        %v1473 = vsel %vm1472, 1, 0
        %vm1474 = vcmp.eq.s32.totalorder %v1473, 1
        %v1475 = vsel %vm1474, %v1055, 0.0
        %v1476 = vsel %vm1474, %v1060, 0.0
        %v1477 = vadd.f32 %v1131, %v1475
        %v1478 = vadd.f32 %v1133, %v1476
        %vm1479 = vcmp.eq.s32.totalorder %v1048, 8
        %v1480 = vsel %vm1479, 1, 0
        %vm1481 = vcmp.eq.s32.totalorder %v1480, 1
        %v1482 = vsel %vm1481, %v1182, 0.0
        %v1483 = vsel %vm1481, %v1184, 0.0
        %v1484 = vadd.f32 %v1477, %v1482
        %v1485 = vadd.f32 %v1478, %v1483
        %vm1486 = vcmp.eq.s32.totalorder %v1048, 1
        %v1487 = vsel %vm1486, 1, 0
        %vm1488 = vcmp.eq.s32.totalorder %v1487, 1
        %v1489 = vsel %vm1488, %v1074, 0.0
        %v1490 = vsel %vm1488, %v1078, 0.0
        %v1491 = vadd.f32 %v1484, %v1489
        %v1492 = vadd.f32 %v1485, %v1490
        %vm1493 = vcmp.eq.s32.totalorder %v1048, 9
        %v1494 = vsel %vm1493, 1, 0
        %vm1495 = vcmp.eq.s32.totalorder %v1494, 1
        %v1496 = vsel %vm1495, %v1188, 0.0
        %v1497 = vsel %vm1495, %v1190, 0.0
        %v1498 = vadd.f32 %v1491, %v1496
        %v1499 = vadd.f32 %v1492, %v1497
        %vm1500 = vcmp.eq.s32.totalorder %v1048, 2
        %v1501 = vsel %vm1500, 1, 0
        %vm1502 = vcmp.eq.s32.totalorder %v1501, 1
        %v1503 = vsel %vm1502, %v1092, 0.0
        %v1504 = vsel %vm1502, %v1096, 0.0
        %v1505 = vadd.f32 %v1498, %v1503
        %v1506 = vadd.f32 %v1499, %v1504
        %vm1507 = vcmp.eq.s32.totalorder %v1048, 10
        %v1508 = vsel %vm1507, 1, 0
        %vm1509 = vcmp.eq.s32.totalorder %v1508, 1
        %v1510 = vsel %vm1509, %v1194, 0.0
        %v1511 = vsel %vm1509, %v1196, 0.0
        %v1512 = vadd.f32 %v1505, %v1510
        %v1513 = vadd.f32 %v1506, %v1511
        %v1514 = vpack.c.bf16 %v1513, %v1512
        %v1516 = vunpack.c.l.b16 %v1514
        %v1517 = vunpack.c.h.b16 %v1514
        %v1518 = vpack.c.b16 %v1516, %v1516
        %v1519 = vpack.c.b16 %v1517, %v1517
        %1522 = vst [vmem:[%s518] sm:$0xf] %v1518
        %1523 = vst [vmem:[%s518 + $0x4] sm:$0xf] %v1519
        %s1524 = sand.u32 %s325, 1
        %s1525 = scalar_lea.sflag [#allocation4], %s1524
        %s1526 = sand.u32 %s325, 1
        %s1527 = smul.addr %s1526, 16
        %s1528 = scalar_lea.vmem [#allocation7], %s1527
        %s1529 = sand.u32 %s351, 1
        %s1530 = scalar_lea.sflag [#allocation9], %s1529
        %s1531 = sand.u32 %s351, 1
        %s1532 = smul.addr %s1531, 8
        %s1533 = scalar_lea.vmem [#allocation8], %s1532
        // Predicated region
        $region81: #{tpu_custom_call.1} parent=71 // pred_check
          %p1534 = pneg %p335
        $region82: #{tpu_custom_call.1} parent=71 // pred_check_branch
          %1536 = sbr.rel (%p1534) target = $region84
        $region83: #{tpu_custom_call.1} parent=71 // pred_region
          %s1537 = smul.u32 2, %s34
          %s1539 = ssub.s32 256, 256
          %1540 = vsyncadd %s1525, %s1539
          %s1541 = smul.addr %s1537, 2
          %s1542 = smul.addr %s1541, 64
          %s1543 = scalar_lea.hbm %s13, %s1542
          %s1544 = sshll.u32 %s1528, 4
          %s1545 = int_to_ptr.vmem [resolvable:$true] %s1544
          %1550 = dma.vmem_to_hbm [thread:$0]  %s1545, 256, %s1543, %s1525, 128, 128, 8
        $region84: #{tpu_custom_call.1} parent=71 // pred_fallthru
          _
        // Predicated region
        $region85: #{tpu_custom_call.1} parent=71 // pred_check
          %p1551 = pneg %p361
        $region86: #{tpu_custom_call.1} parent=71 // pred_check_branch
          %1553 = sbr.rel (%p1551) target = $region88
        $region87: #{tpu_custom_call.1} parent=71 // pred_region
          %s1554 = smul.u32 2, %s34
          %s1556 = ssub.s32 128, 128
          %1557 = vsyncadd %s1530, %s1556
          %s1558 = smul.addr %s1554, 64
          %s1559 = scalar_lea.hbm %s14, %s1558
          %s1560 = sshll.u32 %s1533, 4
          %s1561 = int_to_ptr.vmem [resolvable:$true] %s1560
          %1566 = dma.vmem_to_hbm [thread:$0]  %s1561, 128, %s1559, %s1530, 64, 64, 4
        $region88: #{tpu_custom_call.1} parent=71 // pred_fallthru
          _
      $region72: #{tpu_custom_call.1} parent=5 // pred_fallthru
        _
      %p1567 = scmp.le.s32.totalorder 2, %s29
      // Predicated region
      $region89: #{tpu_custom_call.1} parent=5 // pred_check
        %p1568 = pneg %p1567
      $region90: #{tpu_custom_call.1} parent=5 // pred_check_branch
        %1570 = sbr.rel (%p1568) target = $region92
      $region91: #{tpu_custom_call.1} parent=5 // pred_region
        %s1571 = ssub.s32 %s29, 2
        // Predicated region
        $region93: #{tpu_custom_call.1} parent=91 // pred_check
          %p1572 = pneg %p341
        $region94: #{tpu_custom_call.1} parent=91 // pred_check_branch
          %1574 = sbr.rel (%p1572) target = $region96
        $region95: #{tpu_custom_call.1} parent=91 // pred_region
          %s1575 = sand.u32 %s326, 1
          %s1576 = scalar_lea.sflag [#allocation4], %s1575
          %s1577 = sand.u32 %s326, 1
          %s1578 = smul.addr %s1577, 16
          %s1579 = scalar_lea.vmem [#allocation7], %s1578
          %1580 = dma.done %s1576, 256
        $region96: #{tpu_custom_call.1} parent=91 // pred_fallthru
          _
        // Predicated region
        $region97: #{tpu_custom_call.1} parent=91 // pred_check
          %p1581 = pneg %p367
        $region98: #{tpu_custom_call.1} parent=91 // pred_check_branch
          %1583 = sbr.rel (%p1581) target = $region100
        $region99: #{tpu_custom_call.1} parent=91 // pred_region
          %s1584 = sand.u32 %s352, 1
          %s1585 = scalar_lea.sflag [#allocation9], %s1584
          %s1586 = sand.u32 %s352, 1
          %s1587 = smul.addr %s1586, 8
          %s1588 = scalar_lea.vmem [#allocation8], %s1587
          %1589 = dma.done %s1585, 128
        $region100: #{tpu_custom_call.1} parent=91 // pred_fallthru
          _
      $region92: #{tpu_custom_call.1} parent=5 // pred_fallthru
        _
    $region6: #{tpu_custom_call.1} parent=1 // loop_footer
      %s33 = sadd.s32 1, %s29
    $region7: #{tpu_custom_call.1} parent=1 // loop_footer_branch
      %28 = sbr.rel target = $region3
    $region8: #{tpu_custom_call.1} parent=1 // loop_exit
      _
    %1590 = vsyncpa [#allocation3], 1
    %s1591 = scalar_lea.sflag [#allocation3], 1
    %1592 = vsyncpa %s1591, 1
    %1593 = vsyncpa [#allocation6], 1
    %1594 = vsyncpa [#allocation4], 1
    %s1595 = scalar_lea.sflag [#allocation4], 1
    %1596 = vsyncpa %s1595, 1
    %1597 = vsyncpa [#allocation9], 1
    %s1598 = scalar_lea.sflag [#allocation9], 1
    %1599 = vsyncpa %s1598, 1

</llo_original>
